<compile_context>
chip_gen: v7x
topology: tpu7x:2x2x1
jax: 0.10.0
libtpu: 0.0.40
codegen_flags: <defaults>
</compile_context>

<pallas_src>
import math
import functools

import jax
import jax.numpy as jnp
from jax.experimental import pallas as pl
from jax.experimental.pallas import tpu as pltpu

EPS = 1e-6  # PyTorch `Norm` default eps (added to std, not var)

_LAYER_KEYS = ("n1a", "n1b", "wq", "bq", "wk", "bk", "wv", "bv",
               "wo", "bo", "n2a", "n2b", "w1", "b1", "w2", "b2")
_BF16_KEYS = {"wq", "wk", "wv", "wo", "w1", "w2"}


# ----------------------------------------------------------------------------
# in-kernel math
# ----------------------------------------------------------------------------
def _layer_norm(x, alpha, bias):
    # PyTorch Norm: alpha * (x - mean) / (x.std(unbiased=True) + eps) + bias
    d = x.shape[-1]
    mean = jnp.mean(x, axis=-1, keepdims=True)
    ctr = x - mean
    var = jnp.sum(ctr * ctr, axis=-1, keepdims=True) * (1.0 / (d - 1))   # two-pass, unbiased
    inv = 1.0 / (jnp.sqrt(var) + EPS)          # exact reciprocal; EUP has slack here
    return alpha * ctr * inv + bias


# ----------------------------------------------------------------------------
# fused encoder kernel: PE add + one encoder layer per grid step + final norm
# grid = (B, n_layers); residual carried in VMEM scratch across the layer axis
# ----------------------------------------------------------------------------
def encoder_kernel(x_ref, m_ref, pe_ref,
                   n1a_ref, n1b_ref, wq_ref, bq_ref, wk_ref, bk_ref,
                   wv_ref, bv_ref, wo_ref, bo_ref, n2a_ref, n2b_ref,
                   w1_ref, b1_ref, w2_ref, b2_ref,
                   fna_ref, fnb_ref, o_ref, x_sc, *, heads, d_model):
    l = pl.program_id(1)
    n_layers = pl.num_programs(1)
    S, D = x_sc.shape
    dk = D // heads

    # ---- l == 0: embedding scale + positional encoding (dropout = identity) ----
    @pl.when(l == 0)
    def _():
        x_sc[...] = x_ref[0] * jnp.float32(math.sqrt(d_model)) + pe_ref[...]

    x = x_sc[...]                                               # residual stream (S, D) f32
    neg = (m_ref[0] - 1.0) * jnp.float32(1e9)                   # additive key-mask bias (1, S)

    # ---- sublayer 1: x = x + MHA(norm1(x)) ----
    x2 = _layer_norm(x, n1a_ref[0], n1b_ref[0])
    x2b = x2.astype(jnp.bfloat16)
    q = jnp.dot(x2b, wq_ref[0], preferred_element_type=jnp.float32) + bq_ref[0]
    k = jnp.dot(x2b, wk_ref[0], preferred_element_type=jnp.float32) + bk_ref[0]
    v = jnp.dot(x2b, wv_ref[0], preferred_element_type=jnp.float32) + bv_ref[0]
    q = q * jnp.float32(1.0 / math.sqrt(dk))    # fold 1/sqrt(dk) into q (S*D, not H*S*S elems)

    # one retile per tensor: (S, H*dk) -> (H, S, dk)  (no per-head slice/stack/concat copies)
    qh = jnp.transpose(q.reshape(S, heads, dk), (1, 0, 2)).astype(jnp.bfloat16)
    kh = jnp.transpose(k.reshape(S, heads, dk), (1, 0, 2)).astype(jnp.bfloat16)
    vh = jnp.transpose(v.reshape(S, heads, dk), (1, 0, 2)).astype(jnp.bfloat16)

    s = jnp.einsum("hqd,hkd->hqk", qh, kh,
                   preferred_element_type=jnp.float32)          # (H, S, S)
    s = s + neg                                                 # == masked_fill(mask==0, -1e9)
    s = s - jnp.max(s, axis=-1, keepdims=True)
    p = jnp.exp(s)
    p = p * pl.reciprocal(jnp.sum(p, axis=-1, keepdims=True), approx=True)   # EUP

    ctx = jnp.einsum("hqk,hkd->hqd", p.astype(jnp.bfloat16), vh,
                     preferred_element_type=jnp.float32)        # (H, S, dk)
    ctx = jnp.transpose(ctx, (1, 0, 2)).reshape(S, D)           # concat heads: one retile back
    attn = jnp.dot(ctx.astype(jnp.bfloat16), wo_ref[0],
                   preferred_element_type=jnp.float32) + bo_ref[0]
    x = x + attn

    # ---- sublayer 2: x = x + FF(norm2(x)) ----
    x2 = _layer_norm(x, n2a_ref[0], n2b_ref[0])
    h1 = jnp.dot(x2.astype(jnp.bfloat16), w1_ref[0],
                 preferred_element_type=jnp.float32) + b1_ref[0]
    h1 = jnp.maximum(h1, 0.0)
    ff = jnp.dot(h1.astype(jnp.bfloat16), w2_ref[0],
                 preferred_element_type=jnp.float32) + b2_ref[0]
    x = x + ff

    x_sc[...] = x                                               # carry residual to next layer

    # ---- last layer: final Norm fused (no extra HBM round trip) ----
    @pl.when(l == n_layers - 1)
    def _():
        o_ref[0] = _layer_norm(x, fna_ref[...], fnb_ref[...])


# ----------------------------------------------------------------------------
# wrapper
# ----------------------------------------------------------------------------
def _vmem_limit_bytes():
    # 75% of physical VMEM: full 128 MiB part on v5e/v6e, under v7x's 64 MiB.
    try:
        cap = pltpu.get_tpu_info().vmem_capacity_bytes
    except Exception:
        cap = 64 * 1024 * 1024
    return min(cap * 3 // 4, 100 * 1024 * 1024)


def encoder_forward(src, mask, params, *, d_model, heads):
    B, S = src.shape
    D = d_model
    # Embedding lookup (gather) kept as JAX glue.
    x = jnp.take(params["embed"], src, axis=0).astype(jnp.float32)      # (B, S, D)
    pe = params["pe"][:S]
    lw = [params["layers"][k] for k in _LAYER_KEYS]                     # stacked (N, ...)
    n_layers = lw[0].shape[0]

    def layer_spec(a):
        # one layer per grid step along axis 1; weights streamed (double-buffered)
        blk = (1,) + a.shape[1:]
        trail = a.ndim - 1
        return pl.BlockSpec(blk, lambda b, l, _t=trail: (l,) + (0,) * _t)

    kernel = functools.partial(encoder_kernel, heads=heads, d_model=d_model)
    return pl.pallas_call(
        kernel,
        out_shape=jax.ShapeDtypeStruct((B, S, D), jnp.float32),
        grid=(B, n_layers),
        in_specs=[pl.BlockSpec((1, S, D), lambda b, l: (b, 0, 0)),       # x (resident per b)
                  pl.BlockSpec((1, 1, S), lambda b, l: (b, 0, 0)),       # mask
                  pl.BlockSpec((S, D), lambda b, l: (0, 0))]             # pe (grid-invariant)
                 + [layer_spec(a) for a in lw]
                 + [pl.BlockSpec((1, D), lambda b, l: (0, 0)),           # final norm alpha
                    pl.BlockSpec((1, D), lambda b, l: (0, 0))],          # final norm bias
        out_specs=pl.BlockSpec((1, S, D), lambda b, l: (b, 0, 0)),       # resident across l
        scratch_shapes=[pltpu.VMEM((S, D), jnp.float32)],                # residual carry
        compiler_params=pltpu.CompilerParams(
            dimension_semantics=("parallel", "arbitrary"),
            vmem_limit_bytes=_vmem_limit_bytes()),
    )(x, mask, pe, *lw, params["norm_a"], params["norm_b"])


# ----------------------------------------------------------------------------
# deterministic parameter init
# ----------------------------------------------------------------------------
def make_pe(max_len, d_model):
    pe = [[0.0] * d_model for _ in range(max_len)]
    for pos in range(max_len):
        for i in range(0, d_model, 2):
            pe[pos][i] = math.sin(pos / (10000 ** ((2 * i) / d_model)))
            pe[pos][i + 1] = math.cos(pos / (10000 ** ((2 * (i + 1)) / d_model)))
    return jnp.array(pe, dtype=jnp.float32)


def dense_init(key, fan_in, fan_out):
    k1, k2 = jax.random.split(key)
    lim = 1.0 / math.sqrt(fan_in)
    w = jax.random.uniform(k1, (fan_in, fan_out), jnp.float32, -lim, lim)
    b = jax.random.uniform(k2, (1, fan_out), jnp.float32, -lim, lim)
    return w, b


def init_params(key, vocab, d_model, n_layers, d_ff, max_len):
    keys = jax.random.split(key, 1 + n_layers)
    per_layer = {k: [] for k in _LAYER_KEYS}
    for i in range(n_layers):
        ks = jax.random.split(keys[1 + i], 6)
        per_layer["n1a"].append(jnp.ones((1, d_model), jnp.float32))
        per_layer["n1b"].append(jnp.zeros((1, d_model), jnp.float32))
        per_layer["n2a"].append(jnp.ones((1, d_model), jnp.float32))
        per_layer["n2b"].append(jnp.zeros((1, d_model), jnp.float32))
        for name, k_, fi, fo in (("q", ks[0], d_model, d_model),
                                 ("k", ks[1], d_model, d_model),
                                 ("v", ks[2], d_model, d_model),
                                 ("o", ks[3], d_model, d_model),
                                 ("1", ks[4], d_model, d_ff),
                                 ("2", ks[5], d_ff, d_model)):
            w, b = dense_init(k_, fi, fo)
            per_layer["w" + name].append(w)
            per_layer["b" + name].append(b)
    layers = {}
    for k, vals in per_layer.items():
        arr = jnp.stack(vals, axis=0)
        if k in _BF16_KEYS:
            arr = arr.astype(jnp.bfloat16)   # MXU-native storage, half the DMA bytes
        layers[k] = arr
    return {
        "embed": jax.random.normal(keys[0], (vocab, d_model), jnp.float32),
        "pe": make_pe(max_len, d_model),
        "norm_a": jnp.ones((1, d_model), jnp.float32),
        "norm_b": jnp.zeros((1, d_model), jnp.float32),
        "layers": layers,
    }


# ----------------------------------------------------------------------------
# pure-JAX reference (same math, f32 activations) for a correctness check
# ----------------------------------------------------------------------------
def ref_forward(src, mask, params, *, d_model, heads):
    def ln(x, a, b):
        D = x.shape[-1]
        mean = jnp.mean(x, -1, keepdims=True)
        var = jnp.sum((x - mean) ** 2, -1, keepdims=True) / (D - 1)
        return a * (x - mean) / (jnp.sqrt(var) + EPS) + b

    B, S = src.shape
    H, D = heads, d_model
    dk = D // H
    L = params["layers"]
    n_layers = L["wq"].shape[0]
    x = jnp.take(params["embed"], src, axis=0)
    x = x * math.sqrt(d_model) + params["pe"][:S][None]
    for l in range(n_layers):
        f32 = jnp.float32
        wq, wk, wv, wo = (L[k][l].astype(f32) for k in ("wq", "wk", "wv", "wo"))
        w1, w2 = L["w1"][l].astype(f32), L["w2"][l].astype(f32)
        x2 = ln(x, L["n1a"][l], L["n1b"][l])
        q = (x2 @ wq + L["bq"][l]).reshape(B, S, H, dk).transpose(0, 2, 1, 3)
        k = (x2 @ wk + L["bk"][l]).reshape(B, S, H, dk).transpose(0, 2, 1, 3)
        v = (x2 @ wv + L["bv"][l]).reshape(B, S, H, dk).transpose(0, 2, 1, 3)
        s = jnp.einsum("bhqd,bhkd->bhqk", q, k) / math.sqrt(dk)
        s = jnp.where(mask[:, :, None, :] == 0, -1e9, s)
        p = jax.nn.softmax(s, axis=-1)
        o = jnp.einsum("bhqk,bhkd->bhqd", p, v).transpose(0, 2, 1, 3).reshape(B, S, D)
        x = x + o @ wo + L["bo"][l]
        x2 = ln(x, L["n2a"][l], L["n2b"][l])
        hdn = jnp.maximum(x2 @ w1 + L["b1"][l], 0.0)
        x = x + hdn @ w2 + L["b2"][l]
    return ln(x, params["norm_a"], params["norm_b"])


# ----------------------------------------------------------------------------
if __name__ == "__main__":
    VOCAB, D_MODEL, N_LAYERS, HEADS = 100, 32, 2, 4
    D_FF = 4 * D_MODEL          # FeedForward hidden size (torch default is 2048)
    B, S = 2, 8

    key = jax.random.PRNGKey(0)
    k_param, k_src = jax.random.split(key)
    params = init_params(k_param, VOCAB, D_MODEL, N_LAYERS, D_FF, max_len=S)

    src = jax.random.randint(k_src, (B, S), 0, VOCAB, dtype=jnp.int32)
    lengths = jnp.array([S, 5])
    # mask layout: (B, 1, S), 1.0 = attend, 0.0 = masked (as in masked_fill(mask == 0, -1e9))
    mask = (jnp.arange(S)[None, None, :] < lengths[:, None, None]).astype(jnp.float32)

    out = encoder_forward(src, mask, params, d_model=D_MODEL, heads=HEADS)
    out = jax.block_until_ready(out)

    ref = ref_forward(src, mask, params, d_model=D_MODEL, heads=HEADS)
    assert out.shape == (B, S, D_MODEL), out.shape
    # bf16 MXU inputs in the kernel vs an f32 reference -> moderate tolerance
    # (exact layer-norm reciprocal + two-pass variance tightened this from 1e-1).
    assert jnp.allclose(out, ref, atol=5e-2, rtol=2e-2), \
        f"max abs err = {float(jnp.max(jnp.abs(out - ref)))}"

    print("KERNEL_OK")
</pallas_src>

<mosaic_0001>
module attributes {stable_mosaic.version = 11 : i64} {
  func.func @encoder_kernel(%arg0: i32, %arg1: i32, %arg2: memref<1x8x32xf32, #tpu.memory_space<vmem>>, %arg3: memref<1x1x8xf32, #tpu.memory_space<vmem>>, %arg4: memref<8x32xf32, #tpu.memory_space<vmem>>, %arg5: memref<1x1x32xf32, #tpu.memory_space<vmem>>, %arg6: memref<1x1x32xf32, #tpu.memory_space<vmem>>, %arg7: memref<1x32x32xbf16, #tpu.memory_space<vmem>>, %arg8: memref<1x1x32xf32, #tpu.memory_space<vmem>>, %arg9: memref<1x32x32xbf16, #tpu.memory_space<vmem>>, %arg10: memref<1x1x32xf32, #tpu.memory_space<vmem>>, %arg11: memref<1x32x32xbf16, #tpu.memory_space<vmem>>, %arg12: memref<1x1x32xf32, #tpu.memory_space<vmem>>, %arg13: memref<1x32x32xbf16, #tpu.memory_space<vmem>>, %arg14: memref<1x1x32xf32, #tpu.memory_space<vmem>>, %arg15: memref<1x1x32xf32, #tpu.memory_space<vmem>>, %arg16: memref<1x1x32xf32, #tpu.memory_space<vmem>>, %arg17: memref<1x32x128xbf16, #tpu.memory_space<vmem>>, %arg18: memref<1x1x128xf32, #tpu.memory_space<vmem>>, %arg19: memref<1x128x32xbf16, #tpu.memory_space<vmem>>, %arg20: memref<1x1x32xf32, #tpu.memory_space<vmem>>, %arg21: memref<1x32xf32, #tpu.memory_space<vmem>>, %arg22: memref<1x32xf32, #tpu.memory_space<vmem>>, %arg23: memref<1x8x32xf32, #tpu.memory_space<vmem>>, %arg24: memref<8x32xf32, #tpu.memory_space<vmem>>) attributes {dimension_semantics = [#tpu.dimension_semantics<parallel>, #tpu.dimension_semantics<arbitrary>], iteration_bounds = array<i64: 2, 2>, scalar_prefetch = 0 : i64, scratch_operands = 1 : i64, tpu.core_type = #tpu.core_type<tc>, window_params = [{transform_indices = @transform_0, window_bounds = array<i64: 1, 8, 32>}, {transform_indices = @transform_1, window_bounds = array<i64: 1, 1, 8>}, {pipeline_mode = #tpu.pipeline_mode<synchronous>, transform_indices = @transform_2, window_bounds = array<i64: 8, 32>}, {transform_indices = @transform_3, window_bounds = array<i64: 1, 1, 32>}, {transform_indices = @transform_4, window_bounds = array<i64: 1, 1, 32>}, {transform_indices = @transform_5, window_bounds = array<i64: 1, 32, 32>}, {transform_indices = @transform_6, window_bounds = array<i64: 1, 1, 32>}, {transform_indices = @transform_7, window_bounds = array<i64: 1, 32, 32>}, {transform_indices = @transform_8, window_bounds = array<i64: 1, 1, 32>}, {transform_indices = @transform_9, window_bounds = array<i64: 1, 32, 32>}, {transform_indices = @transform_10, window_bounds = array<i64: 1, 1, 32>}, {transform_indices = @transform_11, window_bounds = array<i64: 1, 32, 32>}, {transform_indices = @transform_12, window_bounds = array<i64: 1, 1, 32>}, {transform_indices = @transform_13, window_bounds = array<i64: 1, 1, 32>}, {transform_indices = @transform_14, window_bounds = array<i64: 1, 1, 32>}, {transform_indices = @transform_15, window_bounds = array<i64: 1, 32, 128>}, {transform_indices = @transform_16, window_bounds = array<i64: 1, 1, 128>}, {transform_indices = @transform_17, window_bounds = array<i64: 1, 128, 32>}, {transform_indices = @transform_18, window_bounds = array<i64: 1, 1, 32>}, {pipeline_mode = #tpu.pipeline_mode<synchronous>, transform_indices = @transform_19, window_bounds = array<i64: 1, 32>}, {pipeline_mode = #tpu.pipeline_mode<synchronous>, transform_indices = @transform_20, window_bounds = array<i64: 1, 32>}, {transform_indices = @transform_21, window_bounds = array<i64: 1, 8, 32>}]} {
    %c0_i32 = arith.constant 0 : i32
    %0 = arith.cmpi eq, %arg1, %c0_i32 : i32
    %1 = arith.extui %0 : i1 to i32
    %c0_i32_0 = arith.constant 0 : i32
    %2 = arith.cmpi ne, %1, %c0_i32_0 : i32
    scf.if %2 {
      %c0_81 = arith.constant 0 : index
      %c0_82 = arith.constant 0 : index
      %c0_83 = arith.constant 0 : index
      %145 = vector.load %arg2[%c0_81, %c0_82, %c0_83] : memref<1x8x32xf32, #tpu.memory_space<vmem>>, vector<1x8x32xf32>
      %146 = vector.shape_cast %145 : vector<1x8x32xf32> to vector<8x32xf32>
      %cst_84 = arith.constant 5.65685415 : f32
      %147 = vector.broadcast %cst_84 : f32 to vector<8x32xf32>
      %148 = arith.mulf %146, %147 : vector<8x32xf32>
      %c0_85 = arith.constant 0 : index
      %c0_86 = arith.constant 0 : index
      %149 = vector.load %arg4[%c0_85, %c0_86] : memref<8x32xf32, #tpu.memory_space<vmem>>, vector<8x32xf32>
      %150 = arith.addf %148, %149 : vector<8x32xf32>
      %c0_87 = arith.constant 0 : index
      %c0_88 = arith.constant 0 : index
      %151 = vector.load %arg24[%c0_87, %c0_88] : memref<8x32xf32, #tpu.memory_space<vmem>>, vector<8x32xf32>
      tpu.vector_store %arg24[%c0_87, %c0_88], %150 {strides = array<i32>} : memref<8x32xf32, #tpu.memory_space<vmem>>, vector<8x32xf32>,
    } else {
    }
    %c0 = arith.constant 0 : index
    %c0_1 = arith.constant 0 : index
    %3 = vector.load %arg24[%c0, %c0_1] : memref<8x32xf32, #tpu.memory_space<vmem>>, vector<8x32xf32>
    %c0_2 = arith.constant 0 : index
    %c0_3 = arith.constant 0 : index
    %c0_4 = arith.constant 0 : index
    %4 = vector.load %arg3[%c0_2, %c0_3, %c0_4] : memref<1x1x8xf32, #tpu.memory_space<vmem>>, vector<1x1x8xf32>
    %5 = vector.shape_cast %4 : vector<1x1x8xf32> to vector<1x8xf32>
    %cst = arith.constant 1.000000e+00 : f32
    %6 = vector.broadcast %cst : f32 to vector<1x8xf32>
    %7 = arith.subf %5, %6 : vector<1x8xf32>
    %cst_5 = arith.constant 1.000000e+09 : f32
    %8 = vector.broadcast %cst_5 : f32 to vector<1x8xf32>
    %9 = arith.mulf %7, %8 : vector<1x8xf32>
    %c0_6 = arith.constant 0 : index
    %c0_7 = arith.constant 0 : index
    %c0_8 = arith.constant 0 : index
    %10 = vector.load %arg5[%c0_6, %c0_7, %c0_8] : memref<1x1x32xf32, #tpu.memory_space<vmem>>, vector<1x1x32xf32>
    %11 = vector.shape_cast %10 : vector<1x1x32xf32> to vector<1x32xf32>
    %c0_9 = arith.constant 0 : index
    %c0_10 = arith.constant 0 : index
    %c0_11 = arith.constant 0 : index
    %12 = vector.load %arg6[%c0_9, %c0_10, %c0_11] : memref<1x1x32xf32, #tpu.memory_space<vmem>>, vector<1x1x32xf32>
    %13 = vector.shape_cast %12 : vector<1x1x32xf32> to vector<1x32xf32>
    %cst_12 = arith.constant dense<0.000000e+00> : vector<8xf32>
    %14 = vector.multi_reduction <add>, %3, %cst_12 [1] : vector<8x32xf32> to vector<8xf32>
    %15 = vector.shape_cast %14 : vector<8xf32> to vector<8x1xf32>
    %cst_13 = arith.constant 3.200000e+01 : f32
    %16 = vector.broadcast %cst_13 : f32 to vector<8x1xf32>
    %17 = arith.divf %15, %16 : vector<8x1xf32>
    %18 = vector.broadcast %17 : vector<8x1xf32> to vector<8x32xf32>
    %19 = arith.subf %3, %18 : vector<8x32xf32>
    %20 = arith.mulf %19, %19 : vector<8x32xf32>
    %cst_14 = arith.constant dense<0.000000e+00> : vector<8xf32>
    %21 = vector.multi_reduction <add>, %20, %cst_14 [1] : vector<8x32xf32> to vector<8xf32>
    %22 = vector.shape_cast %21 : vector<8xf32> to vector<8x1xf32>
    %cst_15 = arith.constant 0.0322580636 : f32
    %23 = vector.broadcast %cst_15 : f32 to vector<8x1xf32>
    %24 = arith.mulf %22, %23 : vector<8x1xf32>
    %25 = math.sqrt %24 : vector<8x1xf32>
    %cst_16 = arith.constant 9.99999997E-7 : f32
    %26 = vector.broadcast %cst_16 : f32 to vector<8x1xf32>
    %27 = arith.addf %25, %26 : vector<8x1xf32>
    %cst_17 = arith.constant 1.000000e+00 : f32
    %28 = vector.broadcast %cst_17 : f32 to vector<8x1xf32>
    %29 = arith.divf %28, %27 : vector<8x1xf32>
    %30 = vector.broadcast %11 : vector<1x32xf32> to vector<8x32xf32>
    %31 = arith.mulf %30, %19 : vector<8x32xf32>
    %32 = vector.broadcast %29 : vector<8x1xf32> to vector<8x32xf32>
    %33 = arith.mulf %31, %32 : vector<8x32xf32>
    %34 = vector.broadcast %13 : vector<1x32xf32> to vector<8x32xf32>
    %35 = arith.addf %33, %34 : vector<8x32xf32>
    %36 = arith.truncf %35 : vector<8x32xf32> to vector<8x32xbf16>
    %c0_18 = arith.constant 0 : index
    %c0_19 = arith.constant 0 : index
    %c0_20 = arith.constant 0 : index
    %37 = vector.load %arg7[%c0_18, %c0_19, %c0_20] : memref<1x32x32xbf16, #tpu.memory_space<vmem>>, vector<1x32x32xbf16>
    %38 = vector.shape_cast %37 : vector<1x32x32xbf16> to vector<32x32xbf16>
    %cst_21 = arith.constant dense<0.000000e+00> : vector<8x32xf32>
    %39 = tpu.matmul %36, %38, %cst_21 {dimension_numbers = #tpu.dot_dimension_numbers<[1], [0], [0], [1], [0, 0, 1, 1], [], []>} : vector<8x32xbf16>, vector<32x32xbf16>, vector<8x32xf32> -> vector<8x32xf32>
    %c0_22 = arith.constant 0 : index
    %c0_23 = arith.constant 0 : index
    %c0_24 = arith.constant 0 : index
    %40 = vector.load %arg8[%c0_22, %c0_23, %c0_24] : memref<1x1x32xf32, #tpu.memory_space<vmem>>, vector<1x1x32xf32>
    %41 = vector.shape_cast %40 : vector<1x1x32xf32> to vector<1x32xf32>
    %42 = vector.broadcast %41 : vector<1x32xf32> to vector<8x32xf32>
    %43 = arith.addf %39, %42 : vector<8x32xf32>
    %c0_25 = arith.constant 0 : index
    %c0_26 = arith.constant 0 : index
    %c0_27 = arith.constant 0 : index
    %44 = vector.load %arg9[%c0_25, %c0_26, %c0_27] : memref<1x32x32xbf16, #tpu.memory_space<vmem>>, vector<1x32x32xbf16>
    %45 = vector.shape_cast %44 : vector<1x32x32xbf16> to vector<32x32xbf16>
    %cst_28 = arith.constant dense<0.000000e+00> : vector<8x32xf32>
    %46 = tpu.matmul %36, %45, %cst_28 {dimension_numbers = #tpu.dot_dimension_numbers<[1], [0], [0], [1], [0, 0, 1, 1], [], []>} : vector<8x32xbf16>, vector<32x32xbf16>, vector<8x32xf32> -> vector<8x32xf32>
    %c0_29 = arith.constant 0 : index
    %c0_30 = arith.constant 0 : index
    %c0_31 = arith.constant 0 : index
    %47 = vector.load %arg10[%c0_29, %c0_30, %c0_31] : memref<1x1x32xf32, #tpu.memory_space<vmem>>, vector<1x1x32xf32>
    %48 = vector.shape_cast %47 : vector<1x1x32xf32> to vector<1x32xf32>
    %49 = vector.broadcast %48 : vector<1x32xf32> to vector<8x32xf32>
    %50 = arith.addf %46, %49 : vector<8x32xf32>
    %c0_32 = arith.constant 0 : index
    %c0_33 = arith.constant 0 : index
    %c0_34 = arith.constant 0 : index
    %51 = vector.load %arg11[%c0_32, %c0_33, %c0_34] : memref<1x32x32xbf16, #tpu.memory_space<vmem>>, vector<1x32x32xbf16>
    %52 = vector.shape_cast %51 : vector<1x32x32xbf16> to vector<32x32xbf16>
    %cst_35 = arith.constant dense<0.000000e+00> : vector<8x32xf32>
    %53 = tpu.matmul %36, %52, %cst_35 {dimension_numbers = #tpu.dot_dimension_numbers<[1], [0], [0], [1], [0, 0, 1, 1], [], []>} : vector<8x32xbf16>, vector<32x32xbf16>, vector<8x32xf32> -> vector<8x32xf32>
    %c0_36 = arith.constant 0 : index
    %c0_37 = arith.constant 0 : index
    %c0_38 = arith.constant 0 : index
    %54 = vector.load %arg12[%c0_36, %c0_37, %c0_38] : memref<1x1x32xf32, #tpu.memory_space<vmem>>, vector<1x1x32xf32>
    %55 = vector.shape_cast %54 : vector<1x1x32xf32> to vector<1x32xf32>
    %56 = vector.broadcast %55 : vector<1x32xf32> to vector<8x32xf32>
    %57 = arith.addf %53, %56 : vector<8x32xf32>
    %cst_39 = arith.constant 0.353553385 : f32
    %58 = vector.broadcast %cst_39 : f32 to vector<8x32xf32>
    %59 = arith.mulf %43, %58 : vector<8x32xf32>
    %60 = vector.shape_cast %59 : vector<8x32xf32> to vector<8x4x8xf32>
    %61 = tpu.transpose %60, [1, 0, 2] : vector<8x4x8xf32> -> vector<4x8x8xf32>
    %62 = arith.truncf %61 : vector<4x8x8xf32> to vector<4x8x8xbf16>
    %63 = vector.shape_cast %50 : vector<8x32xf32> to vector<8x4x8xf32>
    %64 = tpu.transpose %63, [1, 0, 2] : vector<8x4x8xf32> -> vector<4x8x8xf32>
    %65 = arith.truncf %64 : vector<4x8x8xf32> to vector<4x8x8xbf16>
    %66 = vector.shape_cast %57 : vector<8x32xf32> to vector<8x4x8xf32>
    %67 = tpu.transpose %66, [1, 0, 2] : vector<8x4x8xf32> -> vector<4x8x8xf32>
    %68 = arith.truncf %67 : vector<4x8x8xf32> to vector<4x8x8xbf16>
    "tpu.trace_start"() <{level = 10 : i32, message = "hqd,hkd->hqk"}> : () -> ()
    %cst_40 = arith.constant dense<0.000000e+00> : vector<4x8x8xf32>
    %69 = tpu.matmul %62, %65, %cst_40 {dimension_numbers = #tpu.dot_dimension_numbers<[2], [2], [1], [1], [0, 0, 0, 1, 1, 1], [0], [0]>} : vector<4x8x8xbf16>, vector<4x8x8xbf16>, vector<4x8x8xf32> -> vector<4x8x8xf32>
    "tpu.trace_stop"() : () -> ()
    %70 = vector.shape_cast %9 : vector<1x8xf32> to vector<1x1x8xf32>
    %71 = vector.broadcast %70 : vector<1x1x8xf32> to vector<4x8x8xf32>
    %72 = arith.addf %69, %71 : vector<4x8x8xf32>
    %cst_41 = arith.constant dense<0xFF800000> : vector<4x8xf32>
    %73 = vector.multi_reduction <maximumf>, %72, %cst_41 [2] : vector<4x8x8xf32> to vector<4x8xf32>
    %74 = vector.shape_cast %73 : vector<4x8xf32> to vector<4x8x1xf32>
    %75 = vector.broadcast %74 : vector<4x8x1xf32> to vector<4x8x8xf32>
    %76 = arith.subf %72, %75 : vector<4x8x8xf32>
    %77 = math.exp %76 : vector<4x8x8xf32>
    %cst_42 = arith.constant dense<0.000000e+00> : vector<4x8xf32>
    %78 = vector.multi_reduction <add>, %77, %cst_42 [2] : vector<4x8x8xf32> to vector<4x8xf32>
    %79 = vector.shape_cast %78 : vector<4x8xf32> to vector<4x8x1xf32>
    %80 = tpu.reciprocal %79 {approx = true} : vector<4x8x1xf32> -> vector<4x8x1xf32>
    %81 = vector.broadcast %80 : vector<4x8x1xf32> to vector<4x8x8xf32>
    %82 = arith.mulf %77, %81 : vector<4x8x8xf32>
    %83 = arith.truncf %82 : vector<4x8x8xf32> to vector<4x8x8xbf16>
    "tpu.trace_start"() <{level = 10 : i32, message = "hqk,hkd->hqd"}> : () -> ()
    %cst_43 = arith.constant dense<0.000000e+00> : vector<4x8x8xf32>
    %84 = tpu.matmul %83, %68, %cst_43 {dimension_numbers = #tpu.dot_dimension_numbers<[2], [1], [1], [2], [0, 0, 0, 1, 1, 2], [0], [0]>} : vector<4x8x8xbf16>, vector<4x8x8xbf16>, vector<4x8x8xf32> -> vector<4x8x8xf32>
    "tpu.trace_stop"() : () -> ()
    %85 = tpu.transpose %84, [1, 0, 2] : vector<4x8x8xf32> -> vector<8x4x8xf32>
    %86 = vector.shape_cast %85 : vector<8x4x8xf32> to vector<8x32xf32>
    %87 = arith.truncf %86 : vector<8x32xf32> to vector<8x32xbf16>
    %c0_44 = arith.constant 0 : index
    %c0_45 = arith.constant 0 : index
    %c0_46 = arith.constant 0 : index
    %88 = vector.load %arg13[%c0_44, %c0_45, %c0_46] : memref<1x32x32xbf16, #tpu.memory_space<vmem>>, vector<1x32x32xbf16>
    %89 = vector.shape_cast %88 : vector<1x32x32xbf16> to vector<32x32xbf16>
    %cst_47 = arith.constant dense<0.000000e+00> : vector<8x32xf32>
    %90 = tpu.matmul %87, %89, %cst_47 {dimension_numbers = #tpu.dot_dimension_numbers<[1], [0], [0], [1], [0, 0, 1, 1], [], []>} : vector<8x32xbf16>, vector<32x32xbf16>, vector<8x32xf32> -> vector<8x32xf32>
    %c0_48 = arith.constant 0 : index
    %c0_49 = arith.constant 0 : index
    %c0_50 = arith.constant 0 : index
    %91 = vector.load %arg14[%c0_48, %c0_49, %c0_50] : memref<1x1x32xf32, #tpu.memory_space<vmem>>, vector<1x1x32xf32>
    %92 = vector.shape_cast %91 : vector<1x1x32xf32> to vector<1x32xf32>
    %93 = vector.broadcast %92 : vector<1x32xf32> to vector<8x32xf32>
    %94 = arith.addf %90, %93 : vector<8x32xf32>
    %95 = arith.addf %3, %94 : vector<8x32xf32>
    %c0_51 = arith.constant 0 : index
    %c0_52 = arith.constant 0 : index
    %c0_53 = arith.constant 0 : index
    %96 = vector.load %arg15[%c0_51, %c0_52, %c0_53] : memref<1x1x32xf32, #tpu.memory_space<vmem>>, vector<1x1x32xf32>
    %97 = vector.shape_cast %96 : vector<1x1x32xf32> to vector<1x32xf32>
    %c0_54 = arith.constant 0 : index
    %c0_55 = arith.constant 0 : index
    %c0_56 = arith.constant 0 : index
    %98 = vector.load %arg16[%c0_54, %c0_55, %c0_56] : memref<1x1x32xf32, #tpu.memory_space<vmem>>, vector<1x1x32xf32>
    %99 = vector.shape_cast %98 : vector<1x1x32xf32> to vector<1x32xf32>
    %cst_57 = arith.constant dense<0.000000e+00> : vector<8xf32>
    %100 = vector.multi_reduction <add>, %95, %cst_57 [1] : vector<8x32xf32> to vector<8xf32>
    %101 = vector.shape_cast %100 : vector<8xf32> to vector<8x1xf32>
    %cst_58 = arith.constant 3.200000e+01 : f32
    %102 = vector.broadcast %cst_58 : f32 to vector<8x1xf32>
    %103 = arith.divf %101, %102 : vector<8x1xf32>
    %104 = vector.broadcast %103 : vector<8x1xf32> to vector<8x32xf32>
    %105 = arith.subf %95, %104 : vector<8x32xf32>
    %106 = arith.mulf %105, %105 : vector<8x32xf32>
    %cst_59 = arith.constant dense<0.000000e+00> : vector<8xf32>
    %107 = vector.multi_reduction <add>, %106, %cst_59 [1] : vector<8x32xf32> to vector<8xf32>
    %108 = vector.shape_cast %107 : vector<8xf32> to vector<8x1xf32>
    %cst_60 = arith.constant 0.0322580636 : f32
    %109 = vector.broadcast %cst_60 : f32 to vector<8x1xf32>
    %110 = arith.mulf %108, %109 : vector<8x1xf32>
    %111 = math.sqrt %110 : vector<8x1xf32>
    %cst_61 = arith.constant 9.99999997E-7 : f32
    %112 = vector.broadcast %cst_61 : f32 to vector<8x1xf32>
    %113 = arith.addf %111, %112 : vector<8x1xf32>
    %cst_62 = arith.constant 1.000000e+00 : f32
    %114 = vector.broadcast %cst_62 : f32 to vector<8x1xf32>
    %115 = arith.divf %114, %113 : vector<8x1xf32>
    %116 = vector.broadcast %97 : vector<1x32xf32> to vector<8x32xf32>
    %117 = arith.mulf %116, %105 : vector<8x32xf32>
    %118 = vector.broadcast %115 : vector<8x1xf32> to vector<8x32xf32>
    %119 = arith.mulf %117, %118 : vector<8x32xf32>
    %120 = vector.broadcast %99 : vector<1x32xf32> to vector<8x32xf32>
    %121 = arith.addf %119, %120 : vector<8x32xf32>
    %122 = arith.truncf %121 : vector<8x32xf32> to vector<8x32xbf16>
    %c0_63 = arith.constant 0 : index
    %c0_64 = arith.constant 0 : index
    %c0_65 = arith.constant 0 : index
    %123 = vector.load %arg17[%c0_63, %c0_64, %c0_65] : memref<1x32x128xbf16, #tpu.memory_space<vmem>>, vector<1x32x128xbf16>
    %124 = vector.shape_cast %123 : vector<1x32x128xbf16> to vector<32x128xbf16>
    %cst_66 = arith.constant dense<0.000000e+00> : vector<8x128xf32>
    %125 = tpu.matmul %122, %124, %cst_66 {dimension_numbers = #tpu.dot_dimension_numbers<[1], [0], [0], [1], [0, 0, 1, 1], [], []>} : vector<8x32xbf16>, vector<32x128xbf16>, vector<8x128xf32> -> vector<8x128xf32>
    %c0_67 = arith.constant 0 : index
    %c0_68 = arith.constant 0 : index
    %c0_69 = arith.constant 0 : index
    %126 = vector.load %arg18[%c0_67, %c0_68, %c0_69] : memref<1x1x128xf32, #tpu.memory_space<vmem>>, vector<1x1x128xf32>
    %127 = vector.shape_cast %126 : vector<1x1x128xf32> to vector<1x128xf32>
    %128 = vector.broadcast %127 : vector<1x128xf32> to vector<8x128xf32>
    %129 = arith.addf %125, %128 : vector<8x128xf32>
    %cst_70 = arith.constant 0.000000e+00 : f32
    %130 = vector.broadcast %cst_70 : f32 to vector<8x128xf32>
    %131 = arith.maximumf %129, %130 : vector<8x128xf32>
    %132 = arith.truncf %131 : vector<8x128xf32> to vector<8x128xbf16>
    %c0_71 = arith.constant 0 : index
    %c0_72 = arith.constant 0 : index
    %c0_73 = arith.constant 0 : index
    %133 = vector.load %arg19[%c0_71, %c0_72, %c0_73] : memref<1x128x32xbf16, #tpu.memory_space<vmem>>, vector<1x128x32xbf16>
    %134 = vector.shape_cast %133 : vector<1x128x32xbf16> to vector<128x32xbf16>
    %cst_74 = arith.constant dense<0.000000e+00> : vector<8x32xf32>
    %135 = tpu.matmul %132, %134, %cst_74 {dimension_numbers = #tpu.dot_dimension_numbers<[1], [0], [0], [1], [0, 0, 1, 1], [], []>} : vector<8x128xbf16>, vector<128x32xbf16>, vector<8x32xf32> -> vector<8x32xf32>
    %c0_75 = arith.constant 0 : index
    %c0_76 = arith.constant 0 : index
    %c0_77 = arith.constant 0 : index
    %136 = vector.load %arg20[%c0_75, %c0_76, %c0_77] : memref<1x1x32xf32, #tpu.memory_space<vmem>>, vector<1x1x32xf32>
    %137 = vector.shape_cast %136 : vector<1x1x32xf32> to vector<1x32xf32>
    %138 = vector.broadcast %137 : vector<1x32xf32> to vector<8x32xf32>
    %139 = arith.addf %135, %138 : vector<8x32xf32>
    %140 = arith.addf %95, %139 : vector<8x32xf32>
    %c0_78 = arith.constant 0 : index
    %c0_79 = arith.constant 0 : index
    %141 = vector.load %arg24[%c0_78, %c0_79] : memref<8x32xf32, #tpu.memory_space<vmem>>, vector<8x32xf32>
    tpu.vector_store %arg24[%c0_78, %c0_79], %140 {strides = array<i32>} : memref<8x32xf32, #tpu.memory_space<vmem>>, vector<8x32xf32>,
    %c1_i32 = arith.constant 1 : i32
    %142 = arith.cmpi eq, %arg1, %c1_i32 : i32
    %143 = arith.extui %142 : i1 to i32
    %c0_i32_80 = arith.constant 0 : i32
    %144 = arith.cmpi ne, %143, %c0_i32_80 : i32
    scf.if %144 {
      %c0_81 = arith.constant 0 : index
      %c0_82 = arith.constant 0 : index
      %145 = vector.load %arg21[%c0_81, %c0_82] : memref<1x32xf32, #tpu.memory_space<vmem>>, vector<1x32xf32>
      %c0_83 = arith.constant 0 : index
      %c0_84 = arith.constant 0 : index
      %146 = vector.load %arg22[%c0_83, %c0_84] : memref<1x32xf32, #tpu.memory_space<vmem>>, vector<1x32xf32>
      %cst_85 = arith.constant dense<0.000000e+00> : vector<8xf32>
      %147 = vector.multi_reduction <add>, %140, %cst_85 [1] : vector<8x32xf32> to vector<8xf32>
      %148 = vector.shape_cast %147 : vector<8xf32> to vector<8x1xf32>
      %cst_86 = arith.constant 3.200000e+01 : f32
      %149 = vector.broadcast %cst_86 : f32 to vector<8x1xf32>
      %150 = arith.divf %148, %149 : vector<8x1xf32>
      %151 = vector.broadcast %150 : vector<8x1xf32> to vector<8x32xf32>
      %152 = arith.subf %140, %151 : vector<8x32xf32>
      %153 = arith.mulf %152, %152 : vector<8x32xf32>
      %cst_87 = arith.constant dense<0.000000e+00> : vector<8xf32>
      %154 = vector.multi_reduction <add>, %153, %cst_87 [1] : vector<8x32xf32> to vector<8xf32>
      %155 = vector.shape_cast %154 : vector<8xf32> to vector<8x1xf32>
      %cst_88 = arith.constant 0.0322580636 : f32
      %156 = vector.broadcast %cst_88 : f32 to vector<8x1xf32>
      %157 = arith.mulf %155, %156 : vector<8x1xf32>
      %158 = math.sqrt %157 : vector<8x1xf32>
      %cst_89 = arith.constant 9.99999997E-7 : f32
      %159 = vector.broadcast %cst_89 : f32 to vector<8x1xf32>
      %160 = arith.addf %158, %159 : vector<8x1xf32>
      %cst_90 = arith.constant 1.000000e+00 : f32
      %161 = vector.broadcast %cst_90 : f32 to vector<8x1xf32>
      %162 = arith.divf %161, %160 : vector<8x1xf32>
      %163 = vector.broadcast %145 : vector<1x32xf32> to vector<8x32xf32>
      %164 = arith.mulf %163, %152 : vector<8x32xf32>
      %165 = vector.broadcast %162 : vector<8x1xf32> to vector<8x32xf32>
      %166 = arith.mulf %164, %165 : vector<8x32xf32>
      %167 = vector.broadcast %146 : vector<1x32xf32> to vector<8x32xf32>
      %168 = arith.addf %166, %167 : vector<8x32xf32>
      %c0_91 = arith.constant 0 : index
      %c0_92 = arith.constant 0 : index
      %c0_93 = arith.constant 0 : index
      %169 = vector.load %arg23[%c0_91, %c0_92, %c0_93] : memref<1x8x32xf32, #tpu.memory_space<vmem>>, vector<1x8x32xf32>
      %170 = vector.shape_cast %169 : vector<1x8x32xf32> to vector<8x32xf32>
      %171 = vector.shape_cast %168 : vector<8x32xf32> to vector<1x8x32xf32>
      tpu.vector_store %arg23[%c0_91, %c0_92, %c0_93], %171 {strides = array<i32>} : memref<1x8x32xf32, #tpu.memory_space<vmem>>, vector<1x8x32xf32>,
    } else {
    }
    return
  }
  func.func @transform_0(%arg0: i32, %arg1: i32) -> (i32, i32, i32) {
    %c0_i32 = arith.constant 0 : i32
    %c0_i32_0 = arith.constant 0 : i32
    %c0_i32_1 = arith.constant 0 : i32
    return %arg0, %c0_i32, %c0_i32_0 : i32, i32, i32
  }
  func.func @transform_1(%arg0: i32, %arg1: i32) -> (i32, i32, i32) {
    %c0_i32 = arith.constant 0 : i32
    %c0_i32_0 = arith.constant 0 : i32
    %c0_i32_1 = arith.constant 0 : i32
    return %arg0, %c0_i32, %c0_i32_0 : i32, i32, i32
  }
  func.func @transform_2(%arg0: i32, %arg1: i32) -> (i32, i32) {
    %c0_i32 = arith.constant 0 : i32
    %c0_i32_0 = arith.constant 0 : i32
    %c0_i32_1 = arith.constant 0 : i32
    return %c0_i32, %c0_i32_0 : i32, i32
  }
  func.func @transform_3(%arg0: i32, %arg1: i32) -> (i32, i32, i32) {
    %c0_i32 = arith.constant 0 : i32
    %c0_i32_0 = arith.constant 0 : i32
    %c0_i32_1 = arith.constant 0 : i32
    return %arg1, %c0_i32, %c0_i32_0 : i32, i32, i32
  }
  func.func @transform_4(%arg0: i32, %arg1: i32) -> (i32, i32, i32) {
    %c0_i32 = arith.constant 0 : i32
    %c0_i32_0 = arith.constant 0 : i32
    %c0_i32_1 = arith.constant 0 : i32
    return %arg1, %c0_i32, %c0_i32_0 : i32, i32, i32
  }
  func.func @transform_5(%arg0: i32, %arg1: i32) -> (i32, i32, i32) {
    %c0_i32 = arith.constant 0 : i32
    %c0_i32_0 = arith.constant 0 : i32
    %c0_i32_1 = arith.constant 0 : i32
    return %arg1, %c0_i32, %c0_i32_0 : i32, i32, i32
  }
  func.func @transform_6(%arg0: i32, %arg1: i32) -> (i32, i32, i32) {
    %c0_i32 = arith.constant 0 : i32
    %c0_i32_0 = arith.constant 0 : i32
    %c0_i32_1 = arith.constant 0 : i32
    return %arg1, %c0_i32, %c0_i32_0 : i32, i32, i32
  }
  func.func @transform_7(%arg0: i32, %arg1: i32) -> (i32, i32, i32) {
    %c0_i32 = arith.constant 0 : i32
    %c0_i32_0 = arith.constant 0 : i32
    %c0_i32_1 = arith.constant 0 : i32
    return %arg1, %c0_i32, %c0_i32_0 : i32, i32, i32
  }
  func.func @transform_8(%arg0: i32, %arg1: i32) -> (i32, i32, i32) {
    %c0_i32 = arith.constant 0 : i32
    %c0_i32_0 = arith.constant 0 : i32
    %c0_i32_1 = arith.constant 0 : i32
    return %arg1, %c0_i32, %c0_i32_0 : i32, i32, i32
  }
  func.func @transform_9(%arg0: i32, %arg1: i32) -> (i32, i32, i32) {
    %c0_i32 = arith.constant 0 : i32
    %c0_i32_0 = arith.constant 0 : i32
    %c0_i32_1 = arith.constant 0 : i32
    return %arg1, %c0_i32, %c0_i32_0 : i32, i32, i32
  }
  func.func @transform_10(%arg0: i32, %arg1: i32) -> (i32, i32, i32) {
    %c0_i32 = arith.constant 0 : i32
    %c0_i32_0 = arith.constant 0 : i32
    %c0_i32_1 = arith.constant 0 : i32
    return %arg1, %c0_i32, %c0_i32_0 : i32, i32, i32
  }
  func.func @transform_11(%arg0: i32, %arg1: i32) -> (i32, i32, i32) {
    %c0_i32 = arith.constant 0 : i32
    %c0_i32_0 = arith.constant 0 : i32
    %c0_i32_1 = arith.constant 0 : i32
    return %arg1, %c0_i32, %c0_i32_0 : i32, i32, i32
  }
  func.func @transform_12(%arg0: i32, %arg1: i32) -> (i32, i32, i32) {
    %c0_i32 = arith.constant 0 : i32
    %c0_i32_0 = arith.constant 0 : i32
    %c0_i32_1 = arith.constant 0 : i32
    return %arg1, %c0_i32, %c0_i32_0 : i32, i32, i32
  }
  func.func @transform_13(%arg0: i32, %arg1: i32) -> (i32, i32, i32) {
    %c0_i32 = arith.constant 0 : i32
    %c0_i32_0 = arith.constant 0 : i32
    %c0_i32_1 = arith.constant 0 : i32
    return %arg1, %c0_i32, %c0_i32_0 : i32, i32, i32
  }
  func.func @transform_14(%arg0: i32, %arg1: i32) -> (i32, i32, i32) {
    %c0_i32 = arith.constant 0 : i32
    %c0_i32_0 = arith.constant 0 : i32
    %c0_i32_1 = arith.constant 0 : i32
    return %arg1, %c0_i32, %c0_i32_0 : i32, i32, i32
  }
  func.func @transform_15(%arg0: i32, %arg1: i32) -> (i32, i32, i32) {
    %c0_i32 = arith.constant 0 : i32
    %c0_i32_0 = arith.constant 0 : i32
    %c0_i32_1 = arith.constant 0 : i32
    return %arg1, %c0_i32, %c0_i32_0 : i32, i32, i32
  }
  func.func @transform_16(%arg0: i32, %arg1: i32) -> (i32, i32, i32) {
    %c0_i32 = arith.constant 0 : i32
    %c0_i32_0 = arith.constant 0 : i32
    %c0_i32_1 = arith.constant 0 : i32
    return %arg1, %c0_i32, %c0_i32_0 : i32, i32, i32
  }
  func.func @transform_17(%arg0: i32, %arg1: i32) -> (i32, i32, i32) {
    %c0_i32 = arith.constant 0 : i32
    %c0_i32_0 = arith.constant 0 : i32
    %c0_i32_1 = arith.constant 0 : i32
    return %arg1, %c0_i32, %c0_i32_0 : i32, i32, i32
  }
  func.func @transform_18(%arg0: i32, %arg1: i32) -> (i32, i32, i32) {
    %c0_i32 = arith.constant 0 : i32
    %c0_i32_0 = arith.constant 0 : i32
    %c0_i32_1 = arith.constant 0 : i32
    return %arg1, %c0_i32, %c0_i32_0 : i32, i32, i32
  }
  func.func @transform_19(%arg0: i32, %arg1: i32) -> (i32, i32) {
    %c0_i32 = arith.constant 0 : i32
    %c0_i32_0 = arith.constant 0 : i32
    %c0_i32_1 = arith.constant 0 : i32
    return %c0_i32, %c0_i32_0 : i32, i32
  }
  func.func @transform_20(%arg0: i32, %arg1: i32) -> (i32, i32) {
    %c0_i32 = arith.constant 0 : i32
    %c0_i32_0 = arith.constant 0 : i32
    %c0_i32_1 = arith.constant 0 : i32
    return %c0_i32, %c0_i32_0 : i32, i32
  }
  func.func @transform_21(%arg0: i32, %arg1: i32) -> (i32, i32, i32) {
    %c0_i32 = arith.constant 0 : i32
    %c0_i32_0 = arith.constant 0 : i32
    %c0_i32_1 = arith.constant 0 : i32
    return %arg0, %c0_i32, %c0_i32_0 : i32, i32, i32
  }
}

</mosaic_0001>

<llo_original>
// kernel: tpu_custom_call.1
$region0: #{tpu_custom_call.1}
  #allocation0 [shape = 'u32[]', space=smem, size = 0x4, offset = 0x4, fixed_abs, tag = 'smem constant byte address 0x4 - core index']
  #allocation1 [shape = 'u32[144,128]{1,0:T(1,128)}', space=vmem, size = 0x12000, scoped, tag = 'internal scratch']
  #allocation2 [shape = 'f32[8,32]{1,0:T(8,128)}', space=vmem, size = 0x1000, scoped, tag = 'scratch operand']
  %s0 = inlined_call_operand.hbm [shape: f32[2,8,32], index: 0, kind: input, shape index: {}]
  %s1 = inlined_call_operand.vmem [shape: f32[2,1,8], index: 1, kind: input, shape index: {}]
  %s2 = inlined_call_operand.hbm [shape: f32[8,32], index: 2, kind: input, shape index: {}]
  %s3 = inlined_call_operand.vmem [shape: f32[2,1,32], index: 3, kind: input, shape index: {}]
  %s4 = inlined_call_operand.vmem [shape: f32[2,1,32], index: 4, kind: input, shape index: {}]
  %s5 = inlined_call_operand.vmem [shape: bf16[2,32,32], index: 5, kind: input, shape index: {}]
  %s6 = inlined_call_operand.vmem [shape: f32[2,1,32], index: 6, kind: input, shape index: {}]
  %s7 = inlined_call_operand.vmem [shape: bf16[2,32,32], index: 7, kind: input, shape index: {}]
  %s8 = inlined_call_operand.vmem [shape: f32[2,1,32], index: 8, kind: input, shape index: {}]
  %s9 = inlined_call_operand.vmem [shape: bf16[2,32,32], index: 9, kind: input, shape index: {}]
  %s10 = inlined_call_operand.vmem [shape: f32[2,1,32], index: 10, kind: input, shape index: {}]
  %s11 = inlined_call_operand.vmem [shape: bf16[2,32,32], index: 11, kind: input, shape index: {}]
  %s12 = inlined_call_operand.vmem [shape: f32[2,1,32], index: 12, kind: input, shape index: {}]
  %s13 = inlined_call_operand.vmem [shape: f32[2,1,32], index: 13, kind: input, shape index: {}]
  %s14 = inlined_call_operand.vmem [shape: f32[2,1,32], index: 14, kind: input, shape index: {}]
  %s15 = inlined_call_operand.vmem [shape: bf16[2,32,128], index: 15, kind: input, shape index: {}]
  %s16 = inlined_call_operand.vmem [shape: f32[2,1,128], index: 16, kind: input, shape index: {}]
  %s17 = inlined_call_operand.vmem [shape: bf16[2,128,32], index: 17, kind: input, shape index: {}]
  %s18 = inlined_call_operand.vmem [shape: f32[2,1,32], index: 18, kind: input, shape index: {}]
  %s19 = inlined_call_operand.vmem [shape: f32[1,32], index: 19, kind: input, shape index: {}]
  %s20 = inlined_call_operand.vmem [shape: f32[1,32], index: 20, kind: input, shape index: {}]
  %s21 = inlined_call_operand.hbm [shape: f32[2,8,32], index: 21, kind: output, shape index: {}]
  %s22 = sld [smem:[#allocation0]]
  $region133: #{tpu_custom_call.1} parent=0
    _
  %s24 = ssub.s32 1, %s22
  %s25 = scalar_select 0, %s24, %s22
  $region1: #{tpu_custom_call.1} parent=0
    #allocation3 [shape = 'u8[8192]{0}', space=vmem, size = 0x2000, scoped, tag = 'input window, operand 0']
    #allocation4 [shape = 's32[2]{0}', space=sflag, size = 0x8, scoped, tag = 'scoped memory for tpu_custom_call.1']
    #allocation5 [shape = 's32[2]{0}', space=sflag, size = 0x8, scoped, tag = 'scoped memory for tpu_custom_call.1']
    #allocation6 [shape = 'u8[4096]{0}', space=vmem, size = 0x1000, scoped, tag = 'input window, operand 2, single buffered']
    #allocation7 [shape = 's32[1]{0}', space=sflag, size = 0x4, scoped, tag = 'scoped memory for tpu_custom_call.1']
    #allocation8 [shape = 'u8[8192]{0}', space=vmem, size = 0x2000, scoped, tag = 'output window, operand 0']
    %26 = vsyncpa [#allocation4], 0
    %s27 = scalar_lea.sflag [#allocation4], 1
    %28 = vsyncpa %s27, 0
    %29 = vsyncpa [#allocation7], 0
    %30 = vsyncpa [#allocation5], 0
    %s31 = scalar_lea.sflag [#allocation5], 1
    %32 = vsyncpa %s31, 0
    loop: start=0, step=1, limit=6
    $region2: #{tpu_custom_call.1} parent=1 // loop_pre_header
      _
    $region3: #{tpu_custom_call.1} parent=1 // loop_header
      %s34 = sphi 0, %s38
      %p35 = scmp.ge.s32.totalorder %s34, 6
      %s41 = sphi 0, %s53
      %s42 = sphi 0, %s49
      %s43 = sphi 0, %s41
      %s44 = sphi 0, %s42
      %s45 = sphi 0, %s43
      %s46 = sphi 0, %s44
      %s56 = sphi 0, %s58
      %s59 = sphi 0, %s56
      %s60 = sphi 0, %s59
      %s76 = sphi 0, %s60
      %s82 = sphi 0, %s84
      %s85 = sphi 0, %s82
      %s86 = sphi 0, %s85
      %s102 = sphi 0, %s86
      %s106 = sphi 0, %s106
      %s108 = sphi 0, %s106
      %s109 = sphi 0, %s108
      %s123 = sphi 0, %s109
      %s129 = sphi 0, %s131
      %s132 = sphi 0, %s129
      %s133 = sphi 0, %s132
      %s149 = sphi 0, %s133
      %s155 = sphi 0, %s157
      %s158 = sphi 0, %s155
      %s159 = sphi 0, %s158
      %s175 = sphi 0, %s159
      %s181 = sphi 0, %s183
      %s184 = sphi 0, %s181
      %s185 = sphi 0, %s184
      %s201 = sphi 0, %s185
      %s207 = sphi 0, %s209
      %s210 = sphi 0, %s207
      %s211 = sphi 0, %s210
      %s227 = sphi 0, %s211
      %s233 = sphi 0, %s235
      %s236 = sphi 0, %s233
      %s237 = sphi 0, %s236
      %s253 = sphi 0, %s237
      %s259 = sphi 0, %s261
      %s262 = sphi 0, %s259
      %s263 = sphi 0, %s262
      %s279 = sphi 0, %s263
      %s285 = sphi 0, %s287
      %s288 = sphi 0, %s285
      %s289 = sphi 0, %s288
      %s305 = sphi 0, %s289
      %s311 = sphi 0, %s313
      %s314 = sphi 0, %s311
      %s315 = sphi 0, %s314
      %s331 = sphi 0, %s315
      %s337 = sphi 0, %s339
      %s340 = sphi 0, %s337
      %s341 = sphi 0, %s340
      %s357 = sphi 0, %s341
      %s363 = sphi 0, %s365
      %s366 = sphi 0, %s363
      %s367 = sphi 0, %s366
      %s383 = sphi 0, %s367
      %s389 = sphi 0, %s391
      %s392 = sphi 0, %s389
      %s393 = sphi 0, %s392
      %s409 = sphi 0, %s393
      %s415 = sphi 0, %s417
      %s418 = sphi 0, %s415
      %s419 = sphi 0, %s418
      %s435 = sphi 0, %s419
      %s441 = sphi 0, %s443
      %s444 = sphi 0, %s441
      %s445 = sphi 0, %s444
      %s461 = sphi 0, %s445
      %s467 = sphi 0, %s469
      %s470 = sphi 0, %s467
      %s471 = sphi 0, %s470
      %s487 = sphi 0, %s471
      %s493 = sphi 0, %s495
      %s496 = sphi 0, %s493
      %s497 = sphi 0, %s496
      %s513 = sphi 0, %s497
      %s519 = sphi 0, %s521
      %s522 = sphi 0, %s519
      %s523 = sphi 0, %s522
      %s539 = sphi 0, %s523
      %s543 = sphi 0, %s543
      %s545 = sphi 0, %s543
      %s546 = sphi 0, %s545
      %s560 = sphi 0, %s546
      %s564 = sphi 0, %s564
      %s566 = sphi 0, %s564
      %s567 = sphi 0, %s566
      %s581 = sphi 0, %s567
      %s587 = sphi 0, %s589
      %s590 = sphi 0, %s587
      %s591 = sphi 0, %s590
      %s607 = sphi 0, %s591
    $region4: #{tpu_custom_call.1} parent=1 // loop_header_branch
      %37 = sbr.rel (%p35) target = $region8
    $region5: #{tpu_custom_call.1} parent=1 // loop_body
      %s39 = ssub.s32 %s34, 1
      %s40 = ssub.s32 %s34, 2
      %s47 = sadd.s32 1, %s42
      %p48 = scmp.ge.s32.totalorder %s47, 2
      %s49 = scalar_select %p48, 0, %s47
      %s50 = sadd.s32 1, %s41
      %s51 = scalar_select %p48, %s50, %s41
      %p52 = scmp.ge.s32.totalorder %s51, 2
      %s53 = scalar_select %p52, 0, %s51
      %s54 = ssub.s32 %s41, %s53
      %p55 = scmp.eq.s32.totalorder %s54, 0
      %s57 = sadd.s32 %s56, 1
      %s58 = scalar_select %p55, %s56, %s57
      %p61 = pneg %p55
      %p62 = scmp.eq.s32.totalorder %s34, 3
      %p63 = por %p61, %p62
      %p64 = scmp.ne.s32.totalorder %s56, %s59
      %p65 = scmp.eq.s32.totalorder %s34, 0
      %p66 = por %p64, %p65
      %p67 = scmp.ne.s32.totalorder %s56, %s59
      %p68 = scmp.eq.s32.totalorder %s39, 3
      %p69 = por %p67, %p68
      %p70 = scmp.ne.s32.totalorder %s59, %s60
      %p71 = scmp.eq.s32.totalorder %s39, 0
      %p72 = por %p70, %p71
      %p73 = scmp.ne.s32.totalorder %s59, %s60
      %p74 = scmp.eq.s32.totalorder %s40, 3
      %p75 = por %p73, %p74
      %p77 = scmp.ne.s32.totalorder %s60, %s76
      %p78 = scmp.eq.s32.totalorder %s40, 0
      %p79 = por %p77, %p78
      %s80 = ssub.s32 %s41, %s53
      %p81 = scmp.eq.s32.totalorder %s80, 0
      %s83 = sadd.s32 %s82, 1
      %s84 = scalar_select %p81, %s82, %s83
      %p87 = pneg %p81
      %p88 = scmp.eq.s32.totalorder %s34, 3
      %p89 = por %p87, %p88
      %p90 = scmp.ne.s32.totalorder %s82, %s85
      %p91 = scmp.eq.s32.totalorder %s34, 0
      %p92 = por %p90, %p91
      %p93 = scmp.ne.s32.totalorder %s82, %s85
      %p94 = scmp.eq.s32.totalorder %s39, 3
      %p95 = por %p93, %p94
      %p96 = scmp.ne.s32.totalorder %s85, %s86
      %p97 = scmp.eq.s32.totalorder %s39, 0
      %p98 = por %p96, %p97
      %p99 = scmp.ne.s32.totalorder %s85, %s86
      %p100 = scmp.eq.s32.totalorder %s40, 3
      %p101 = por %p99, %p100
      %p103 = scmp.ne.s32.totalorder %s86, %s102
      %p104 = scmp.eq.s32.totalorder %s40, 0
      %p105 = por %p103, %p104
      %s107 = sadd.s32 %s106, 1
      %p110 = scmp.eq.s32.totalorder %s34, 3
      %p111 = scmp.ne.s32.totalorder %s106, %s108
      %p112 = scmp.eq.s32.totalorder %s34, 0
      %p113 = por %p111, %p112
      %p114 = scmp.ne.s32.totalorder %s106, %s108
      %p115 = scmp.eq.s32.totalorder %s39, 3
      %p116 = por %p114, %p115
      %p117 = scmp.ne.s32.totalorder %s108, %s109
      %p118 = scmp.eq.s32.totalorder %s39, 0
      %p119 = por %p117, %p118
      %p120 = scmp.ne.s32.totalorder %s108, %s109
      %p121 = scmp.eq.s32.totalorder %s40, 3
      %p122 = por %p120, %p121
      %p124 = scmp.ne.s32.totalorder %s109, %s123
      %p125 = scmp.eq.s32.totalorder %s40, 0
      %p126 = por %p124, %p125
      %s127 = ssub.s32 %s42, %s49
      %p128 = scmp.eq.s32.totalorder %s127, 0
      %s130 = sadd.s32 %s129, 1
      %s131 = scalar_select %p128, %s129, %s130
      %p134 = pneg %p128
      %p135 = scmp.eq.s32.totalorder %s34, 3
      %p136 = por %p134, %p135
      %p137 = scmp.ne.s32.totalorder %s129, %s132
      %p138 = scmp.eq.s32.totalorder %s34, 0
      %p139 = por %p137, %p138
      %p140 = scmp.ne.s32.totalorder %s129, %s132
      %p141 = scmp.eq.s32.totalorder %s39, 3
      %p142 = por %p140, %p141
      %p143 = scmp.ne.s32.totalorder %s132, %s133
      %p144 = scmp.eq.s32.totalorder %s39, 0
      %p145 = por %p143, %p144
      %p146 = scmp.ne.s32.totalorder %s132, %s133
      %p147 = scmp.eq.s32.totalorder %s40, 3
      %p148 = por %p146, %p147
      %p150 = scmp.ne.s32.totalorder %s133, %s149
      %p151 = scmp.eq.s32.totalorder %s40, 0
      %p152 = por %p150, %p151
      %s153 = ssub.s32 %s42, %s49
      %p154 = scmp.eq.s32.totalorder %s153, 0
      %s156 = sadd.s32 %s155, 1
      %s157 = scalar_select %p154, %s155, %s156
      %p160 = pneg %p154
      %p161 = scmp.eq.s32.totalorder %s34, 3
      %p162 = por %p160, %p161
      %p163 = scmp.ne.s32.totalorder %s155, %s158
      %p164 = scmp.eq.s32.totalorder %s34, 0
      %p165 = por %p163, %p164
      %p166 = scmp.ne.s32.totalorder %s155, %s158
      %p167 = scmp.eq.s32.totalorder %s39, 3
      %p168 = por %p166, %p167
      %p169 = scmp.ne.s32.totalorder %s158, %s159
      %p170 = scmp.eq.s32.totalorder %s39, 0
      %p171 = por %p169, %p170
      %p172 = scmp.ne.s32.totalorder %s158, %s159
      %p173 = scmp.eq.s32.totalorder %s40, 3
      %p174 = por %p172, %p173
      %p176 = scmp.ne.s32.totalorder %s159, %s175
      %p177 = scmp.eq.s32.totalorder %s40, 0
      %p178 = por %p176, %p177
      %s179 = ssub.s32 %s42, %s49
      %p180 = scmp.eq.s32.totalorder %s179, 0
      %s182 = sadd.s32 %s181, 1
      %s183 = scalar_select %p180, %s181, %s182
      %p186 = pneg %p180
      %p187 = scmp.eq.s32.totalorder %s34, 3
      %p188 = por %p186, %p187
      %p189 = scmp.ne.s32.totalorder %s181, %s184
      %p190 = scmp.eq.s32.totalorder %s34, 0
      %p191 = por %p189, %p190
      %p192 = scmp.ne.s32.totalorder %s181, %s184
      %p193 = scmp.eq.s32.totalorder %s39, 3
      %p194 = por %p192, %p193
      %p195 = scmp.ne.s32.totalorder %s184, %s185
      %p196 = scmp.eq.s32.totalorder %s39, 0
      %p197 = por %p195, %p196
      %p198 = scmp.ne.s32.totalorder %s184, %s185
      %p199 = scmp.eq.s32.totalorder %s40, 3
      %p200 = por %p198, %p199
      %p202 = scmp.ne.s32.totalorder %s185, %s201
      %p203 = scmp.eq.s32.totalorder %s40, 0
      %p204 = por %p202, %p203
      %s205 = ssub.s32 %s42, %s49
      %p206 = scmp.eq.s32.totalorder %s205, 0
      %s208 = sadd.s32 %s207, 1
      %s209 = scalar_select %p206, %s207, %s208
      %p212 = pneg %p206
      %p213 = scmp.eq.s32.totalorder %s34, 3
      %p214 = por %p212, %p213
      %p215 = scmp.ne.s32.totalorder %s207, %s210
      %p216 = scmp.eq.s32.totalorder %s34, 0
      %p217 = por %p215, %p216
      %p218 = scmp.ne.s32.totalorder %s207, %s210
      %p219 = scmp.eq.s32.totalorder %s39, 3
      %p220 = por %p218, %p219
      %p221 = scmp.ne.s32.totalorder %s210, %s211
      %p222 = scmp.eq.s32.totalorder %s39, 0
      %p223 = por %p221, %p222
      %p224 = scmp.ne.s32.totalorder %s210, %s211
      %p225 = scmp.eq.s32.totalorder %s40, 3
      %p226 = por %p224, %p225
      %p228 = scmp.ne.s32.totalorder %s211, %s227
      %p229 = scmp.eq.s32.totalorder %s40, 0
      %p230 = por %p228, %p229
      %s231 = ssub.s32 %s42, %s49
      %p232 = scmp.eq.s32.totalorder %s231, 0
      %s234 = sadd.s32 %s233, 1
      %s235 = scalar_select %p232, %s233, %s234
      %p238 = pneg %p232
      %p239 = scmp.eq.s32.totalorder %s34, 3
      %p240 = por %p238, %p239
      %p241 = scmp.ne.s32.totalorder %s233, %s236
      %p242 = scmp.eq.s32.totalorder %s34, 0
      %p243 = por %p241, %p242
      %p244 = scmp.ne.s32.totalorder %s233, %s236
      %p245 = scmp.eq.s32.totalorder %s39, 3
      %p246 = por %p244, %p245
      %p247 = scmp.ne.s32.totalorder %s236, %s237
      %p248 = scmp.eq.s32.totalorder %s39, 0
      %p249 = por %p247, %p248
      %p250 = scmp.ne.s32.totalorder %s236, %s237
      %p251 = scmp.eq.s32.totalorder %s40, 3
      %p252 = por %p250, %p251
      %p254 = scmp.ne.s32.totalorder %s237, %s253
      %p255 = scmp.eq.s32.totalorder %s40, 0
      %p256 = por %p254, %p255
      %s257 = ssub.s32 %s42, %s49
      %p258 = scmp.eq.s32.totalorder %s257, 0
      %s260 = sadd.s32 %s259, 1
      %s261 = scalar_select %p258, %s259, %s260
      %p264 = pneg %p258
      %p265 = scmp.eq.s32.totalorder %s34, 3
      %p266 = por %p264, %p265
      %p267 = scmp.ne.s32.totalorder %s259, %s262
      %p268 = scmp.eq.s32.totalorder %s34, 0
      %p269 = por %p267, %p268
      %p270 = scmp.ne.s32.totalorder %s259, %s262
      %p271 = scmp.eq.s32.totalorder %s39, 3
      %p272 = por %p270, %p271
      %p273 = scmp.ne.s32.totalorder %s262, %s263
      %p274 = scmp.eq.s32.totalorder %s39, 0
      %p275 = por %p273, %p274
      %p276 = scmp.ne.s32.totalorder %s262, %s263
      %p277 = scmp.eq.s32.totalorder %s40, 3
      %p278 = por %p276, %p277
      %p280 = scmp.ne.s32.totalorder %s263, %s279
      %p281 = scmp.eq.s32.totalorder %s40, 0
      %p282 = por %p280, %p281
      %s283 = ssub.s32 %s42, %s49
      %p284 = scmp.eq.s32.totalorder %s283, 0
      %s286 = sadd.s32 %s285, 1
      %s287 = scalar_select %p284, %s285, %s286
      %p290 = pneg %p284
      %p291 = scmp.eq.s32.totalorder %s34, 3
      %p292 = por %p290, %p291
      %p293 = scmp.ne.s32.totalorder %s285, %s288
      %p294 = scmp.eq.s32.totalorder %s34, 0
      %p295 = por %p293, %p294
      %p296 = scmp.ne.s32.totalorder %s285, %s288
      %p297 = scmp.eq.s32.totalorder %s39, 3
      %p298 = por %p296, %p297
      %p299 = scmp.ne.s32.totalorder %s288, %s289
      %p300 = scmp.eq.s32.totalorder %s39, 0
      %p301 = por %p299, %p300
      %p302 = scmp.ne.s32.totalorder %s288, %s289
      %p303 = scmp.eq.s32.totalorder %s40, 3
      %p304 = por %p302, %p303
      %p306 = scmp.ne.s32.totalorder %s289, %s305
      %p307 = scmp.eq.s32.totalorder %s40, 0
      %p308 = por %p306, %p307
      %s309 = ssub.s32 %s42, %s49
      %p310 = scmp.eq.s32.totalorder %s309, 0
      %s312 = sadd.s32 %s311, 1
      %s313 = scalar_select %p310, %s311, %s312
      %p316 = pneg %p310
      %p317 = scmp.eq.s32.totalorder %s34, 3
      %p318 = por %p316, %p317
      %p319 = scmp.ne.s32.totalorder %s311, %s314
      %p320 = scmp.eq.s32.totalorder %s34, 0
      %p321 = por %p319, %p320
      %p322 = scmp.ne.s32.totalorder %s311, %s314
      %p323 = scmp.eq.s32.totalorder %s39, 3
      %p324 = por %p322, %p323
      %p325 = scmp.ne.s32.totalorder %s314, %s315
      %p326 = scmp.eq.s32.totalorder %s39, 0
      %p327 = por %p325, %p326
      %p328 = scmp.ne.s32.totalorder %s314, %s315
      %p329 = scmp.eq.s32.totalorder %s40, 3
      %p330 = por %p328, %p329
      %p332 = scmp.ne.s32.totalorder %s315, %s331
      %p333 = scmp.eq.s32.totalorder %s40, 0
      %p334 = por %p332, %p333
      %s335 = ssub.s32 %s42, %s49
      %p336 = scmp.eq.s32.totalorder %s335, 0
      %s338 = sadd.s32 %s337, 1
      %s339 = scalar_select %p336, %s337, %s338
      %p342 = pneg %p336
      %p343 = scmp.eq.s32.totalorder %s34, 3
      %p344 = por %p342, %p343
      %p345 = scmp.ne.s32.totalorder %s337, %s340
      %p346 = scmp.eq.s32.totalorder %s34, 0
      %p347 = por %p345, %p346
      %p348 = scmp.ne.s32.totalorder %s337, %s340
      %p349 = scmp.eq.s32.totalorder %s39, 3
      %p350 = por %p348, %p349
      %p351 = scmp.ne.s32.totalorder %s340, %s341
      %p352 = scmp.eq.s32.totalorder %s39, 0
      %p353 = por %p351, %p352
      %p354 = scmp.ne.s32.totalorder %s340, %s341
      %p355 = scmp.eq.s32.totalorder %s40, 3
      %p356 = por %p354, %p355
      %p358 = scmp.ne.s32.totalorder %s341, %s357
      %p359 = scmp.eq.s32.totalorder %s40, 0
      %p360 = por %p358, %p359
      %s361 = ssub.s32 %s42, %s49
      %p362 = scmp.eq.s32.totalorder %s361, 0
      %s364 = sadd.s32 %s363, 1
      %s365 = scalar_select %p362, %s363, %s364
      %p368 = pneg %p362
      %p369 = scmp.eq.s32.totalorder %s34, 3
      %p370 = por %p368, %p369
      %p371 = scmp.ne.s32.totalorder %s363, %s366
      %p372 = scmp.eq.s32.totalorder %s34, 0
      %p373 = por %p371, %p372
      %p374 = scmp.ne.s32.totalorder %s363, %s366
      %p375 = scmp.eq.s32.totalorder %s39, 3
      %p376 = por %p374, %p375
      %p377 = scmp.ne.s32.totalorder %s366, %s367
      %p378 = scmp.eq.s32.totalorder %s39, 0
      %p379 = por %p377, %p378
      %p380 = scmp.ne.s32.totalorder %s366, %s367
      %p381 = scmp.eq.s32.totalorder %s40, 3
      %p382 = por %p380, %p381
      %p384 = scmp.ne.s32.totalorder %s367, %s383
      %p385 = scmp.eq.s32.totalorder %s40, 0
      %p386 = por %p384, %p385
      %s387 = ssub.s32 %s42, %s49
      %p388 = scmp.eq.s32.totalorder %s387, 0
      %s390 = sadd.s32 %s389, 1
      %s391 = scalar_select %p388, %s389, %s390
      %p394 = pneg %p388
      %p395 = scmp.eq.s32.totalorder %s34, 3
      %p396 = por %p394, %p395
      %p397 = scmp.ne.s32.totalorder %s389, %s392
      %p398 = scmp.eq.s32.totalorder %s34, 0
      %p399 = por %p397, %p398
      %p400 = scmp.ne.s32.totalorder %s389, %s392
      %p401 = scmp.eq.s32.totalorder %s39, 3
      %p402 = por %p400, %p401
      %p403 = scmp.ne.s32.totalorder %s392, %s393
      %p404 = scmp.eq.s32.totalorder %s39, 0
      %p405 = por %p403, %p404
      %p406 = scmp.ne.s32.totalorder %s392, %s393
      %p407 = scmp.eq.s32.totalorder %s40, 3
      %p408 = por %p406, %p407
      %p410 = scmp.ne.s32.totalorder %s393, %s409
      %p411 = scmp.eq.s32.totalorder %s40, 0
      %p412 = por %p410, %p411
      %s413 = ssub.s32 %s42, %s49
      %p414 = scmp.eq.s32.totalorder %s413, 0
      %s416 = sadd.s32 %s415, 1
      %s417 = scalar_select %p414, %s415, %s416
      %p420 = pneg %p414
      %p421 = scmp.eq.s32.totalorder %s34, 3
      %p422 = por %p420, %p421
      %p423 = scmp.ne.s32.totalorder %s415, %s418
      %p424 = scmp.eq.s32.totalorder %s34, 0
      %p425 = por %p423, %p424
      %p426 = scmp.ne.s32.totalorder %s415, %s418
      %p427 = scmp.eq.s32.totalorder %s39, 3
      %p428 = por %p426, %p427
      %p429 = scmp.ne.s32.totalorder %s418, %s419
      %p430 = scmp.eq.s32.totalorder %s39, 0
      %p431 = por %p429, %p430
      %p432 = scmp.ne.s32.totalorder %s418, %s419
      %p433 = scmp.eq.s32.totalorder %s40, 3
      %p434 = por %p432, %p433
      %p436 = scmp.ne.s32.totalorder %s419, %s435
      %p437 = scmp.eq.s32.totalorder %s40, 0
      %p438 = por %p436, %p437
      %s439 = ssub.s32 %s42, %s49
      %p440 = scmp.eq.s32.totalorder %s439, 0
      %s442 = sadd.s32 %s441, 1
      %s443 = scalar_select %p440, %s441, %s442
      %p446 = pneg %p440
      %p447 = scmp.eq.s32.totalorder %s34, 3
      %p448 = por %p446, %p447
      %p449 = scmp.ne.s32.totalorder %s441, %s444
      %p450 = scmp.eq.s32.totalorder %s34, 0
      %p451 = por %p449, %p450
      %p452 = scmp.ne.s32.totalorder %s441, %s444
      %p453 = scmp.eq.s32.totalorder %s39, 3
      %p454 = por %p452, %p453
      %p455 = scmp.ne.s32.totalorder %s444, %s445
      %p456 = scmp.eq.s32.totalorder %s39, 0
      %p457 = por %p455, %p456
      %p458 = scmp.ne.s32.totalorder %s444, %s445
      %p459 = scmp.eq.s32.totalorder %s40, 3
      %p460 = por %p458, %p459
      %p462 = scmp.ne.s32.totalorder %s445, %s461
      %p463 = scmp.eq.s32.totalorder %s40, 0
      %p464 = por %p462, %p463
      %s465 = ssub.s32 %s42, %s49
      %p466 = scmp.eq.s32.totalorder %s465, 0
      %s468 = sadd.s32 %s467, 1
      %s469 = scalar_select %p466, %s467, %s468
      %p472 = pneg %p466
      %p473 = scmp.eq.s32.totalorder %s34, 3
      %p474 = por %p472, %p473
      %p475 = scmp.ne.s32.totalorder %s467, %s470
      %p476 = scmp.eq.s32.totalorder %s34, 0
      %p477 = por %p475, %p476
      %p478 = scmp.ne.s32.totalorder %s467, %s470
      %p479 = scmp.eq.s32.totalorder %s39, 3
      %p480 = por %p478, %p479
      %p481 = scmp.ne.s32.totalorder %s470, %s471
      %p482 = scmp.eq.s32.totalorder %s39, 0
      %p483 = por %p481, %p482
      %p484 = scmp.ne.s32.totalorder %s470, %s471
      %p485 = scmp.eq.s32.totalorder %s40, 3
      %p486 = por %p484, %p485
      %p488 = scmp.ne.s32.totalorder %s471, %s487
      %p489 = scmp.eq.s32.totalorder %s40, 0
      %p490 = por %p488, %p489
      %s491 = ssub.s32 %s42, %s49
      %p492 = scmp.eq.s32.totalorder %s491, 0
      %s494 = sadd.s32 %s493, 1
      %s495 = scalar_select %p492, %s493, %s494
      %p498 = pneg %p492
      %p499 = scmp.eq.s32.totalorder %s34, 3
      %p500 = por %p498, %p499
      %p501 = scmp.ne.s32.totalorder %s493, %s496
      %p502 = scmp.eq.s32.totalorder %s34, 0
      %p503 = por %p501, %p502
      %p504 = scmp.ne.s32.totalorder %s493, %s496
      %p505 = scmp.eq.s32.totalorder %s39, 3
      %p506 = por %p504, %p505
      %p507 = scmp.ne.s32.totalorder %s496, %s497
      %p508 = scmp.eq.s32.totalorder %s39, 0
      %p509 = por %p507, %p508
      %p510 = scmp.ne.s32.totalorder %s496, %s497
      %p511 = scmp.eq.s32.totalorder %s40, 3
      %p512 = por %p510, %p511
      %p514 = scmp.ne.s32.totalorder %s497, %s513
      %p515 = scmp.eq.s32.totalorder %s40, 0
      %p516 = por %p514, %p515
      %s517 = ssub.s32 %s42, %s49
      %p518 = scmp.eq.s32.totalorder %s517, 0
      %s520 = sadd.s32 %s519, 1
      %s521 = scalar_select %p518, %s519, %s520
      %p524 = pneg %p518
      %p525 = scmp.eq.s32.totalorder %s34, 3
      %p526 = por %p524, %p525
      %p527 = scmp.ne.s32.totalorder %s519, %s522
      %p528 = scmp.eq.s32.totalorder %s34, 0
      %p529 = por %p527, %p528
      %p530 = scmp.ne.s32.totalorder %s519, %s522
      %p531 = scmp.eq.s32.totalorder %s39, 3
      %p532 = por %p530, %p531
      %p533 = scmp.ne.s32.totalorder %s522, %s523
      %p534 = scmp.eq.s32.totalorder %s39, 0
      %p535 = por %p533, %p534
      %p536 = scmp.ne.s32.totalorder %s522, %s523
      %p537 = scmp.eq.s32.totalorder %s40, 3
      %p538 = por %p536, %p537
      %p540 = scmp.ne.s32.totalorder %s523, %s539
      %p541 = scmp.eq.s32.totalorder %s40, 0
      %p542 = por %p540, %p541
      %s544 = sadd.s32 %s543, 1
      %p547 = scmp.eq.s32.totalorder %s34, 3
      %p548 = scmp.ne.s32.totalorder %s543, %s545
      %p549 = scmp.eq.s32.totalorder %s34, 0
      %p550 = por %p548, %p549
      %p551 = scmp.ne.s32.totalorder %s543, %s545
      %p552 = scmp.eq.s32.totalorder %s39, 3
      %p553 = por %p551, %p552
      %p554 = scmp.ne.s32.totalorder %s545, %s546
      %p555 = scmp.eq.s32.totalorder %s39, 0
      %p556 = por %p554, %p555
      %p557 = scmp.ne.s32.totalorder %s545, %s546
      %p558 = scmp.eq.s32.totalorder %s40, 3
      %p559 = por %p557, %p558
      %p561 = scmp.ne.s32.totalorder %s546, %s560
      %p562 = scmp.eq.s32.totalorder %s40, 0
      %p563 = por %p561, %p562
      %s565 = sadd.s32 %s564, 1
      %p568 = scmp.eq.s32.totalorder %s34, 3
      %p569 = scmp.ne.s32.totalorder %s564, %s566
      %p570 = scmp.eq.s32.totalorder %s34, 0
      %p571 = por %p569, %p570
      %p572 = scmp.ne.s32.totalorder %s564, %s566
      %p573 = scmp.eq.s32.totalorder %s39, 3
      %p574 = por %p572, %p573
      %p575 = scmp.ne.s32.totalorder %s566, %s567
      %p576 = scmp.eq.s32.totalorder %s39, 0
      %p577 = por %p575, %p576
      %p578 = scmp.ne.s32.totalorder %s566, %s567
      %p579 = scmp.eq.s32.totalorder %s40, 3
      %p580 = por %p578, %p579
      %p582 = scmp.ne.s32.totalorder %s567, %s581
      %p583 = scmp.eq.s32.totalorder %s40, 0
      %p584 = por %p582, %p583
      %s585 = ssub.s32 %s41, %s53
      %p586 = scmp.eq.s32.totalorder %s585, 0
      %s588 = sadd.s32 %s587, 1
      %s589 = scalar_select %p586, %s587, %s588
      %p592 = pneg %p586
      %p593 = scmp.eq.s32.totalorder %s34, 3
      %p594 = por %p592, %p593
      %p595 = scmp.ne.s32.totalorder %s587, %s590
      %p596 = scmp.eq.s32.totalorder %s34, 0
      %p597 = por %p595, %p596
      %p598 = scmp.ne.s32.totalorder %s587, %s590
      %p599 = scmp.eq.s32.totalorder %s39, 3
      %p600 = por %p598, %p599
      %p601 = scmp.ne.s32.totalorder %s590, %s591
      %p602 = scmp.eq.s32.totalorder %s39, 0
      %p603 = por %p601, %p602
      %p604 = scmp.ne.s32.totalorder %s590, %s591
      %p605 = scmp.eq.s32.totalorder %s40, 3
      %p606 = por %p604, %p605
      %p608 = scmp.ne.s32.totalorder %s591, %s607
      %p609 = scmp.eq.s32.totalorder %s40, 0
      %p610 = por %p608, %p609
      %p611 = scmp.le.s32.totalorder 1, %s34
      %p612 = scmp.lt.s32.totalorder %s34, 5
      %p613 = pnand %p611, %p612
      %p614 = pneg %p613
      // Predicated region
      $region9: #{tpu_custom_call.1} parent=5 // pred_check
        _
      $region10: #{tpu_custom_call.1} parent=5 // pred_check_branch
        %616 = sbr.rel (%p613) target = $region12
      $region11: #{tpu_custom_call.1} parent=5 // pred_region
        %s617 = ssub.s32 %s34, 1
        // Predicated region
        $region13: #{tpu_custom_call.1} parent=11 // pred_check
          %p618 = pneg %p119
        $region14: #{tpu_custom_call.1} parent=11 // pred_check_branch
          %620 = sbr.rel (%p618) target = $region16
        $region15: #{tpu_custom_call.1} parent=11 // pred_region
          %s622 = ssub.s32 128, 128
          %623 = vsyncadd [#allocation7], %s622
          %s625 = sshll.u32 [#allocation6], 4
          %s626 = int_to_ptr.vmem [resolvable:$true] %s625
          %628 = dma.hbm_to_vmem [thread:$0]  %s2, 128, %s626, [#allocation7]
        $region16: #{tpu_custom_call.1} parent=11 // pred_fallthru
          _
        // Predicated region
        $region17: #{tpu_custom_call.1} parent=11 // pred_check
          %p629 = pneg %p556
        $region18: #{tpu_custom_call.1} parent=11 // pred_check_branch
          %631 = sbr.rel (%p629) target = $region20
        $region19: #{tpu_custom_call.1} parent=11 // pred_region
          _
        $region20: #{tpu_custom_call.1} parent=11 // pred_fallthru
          _
        // Predicated region
        $region21: #{tpu_custom_call.1} parent=11 // pred_check
          %p632 = pneg %p577
        $region22: #{tpu_custom_call.1} parent=11 // pred_check_branch
          %634 = sbr.rel (%p632) target = $region24
        $region23: #{tpu_custom_call.1} parent=11 // pred_region
          _
        $region24: #{tpu_custom_call.1} parent=11 // pred_fallthru
          _
      $region12: #{tpu_custom_call.1} parent=5 // pred_fallthru
        _
      %p635 = scmp.lt.s32.totalorder %s34, 4
      // Predicated region
      $region25: #{tpu_custom_call.1} parent=5 // pred_check
        %p636 = pneg %p635
      $region26: #{tpu_custom_call.1} parent=5 // pred_check_branch
        %638 = sbr.rel (%p636) target = $region28
      $region27: #{tpu_custom_call.1} parent=5 // pred_region
        // Predicated region
        $region29: #{tpu_custom_call.1} parent=27 // pred_check
          %p639 = pneg %p66
        $region30: #{tpu_custom_call.1} parent=27 // pred_check_branch
          %641 = sbr.rel (%p639) target = $region32
        $region31: #{tpu_custom_call.1} parent=27 // pred_region
          %s642 = sand.u32 %s56, 1
          %s643 = scalar_lea.sflag [#allocation4], %s642
          %s644 = sand.u32 %s56, 1
          %s645 = smul.addr %s644, 8
          %s646 = scalar_lea.vmem [#allocation3], %s645
          %s648 = ssub.s32 128, 128
          %649 = vsyncadd %s643, %s648
          %s650 = smul.addr %s41, 128
          %s651 = scalar_lea.hbm %s0, %s650
          %s653 = sshll.u32 %s646, 4
          %s654 = int_to_ptr.vmem [resolvable:$true] %s653
          %656 = dma.hbm_to_vmem [thread:$0]  %s651, 128, %s654, %s643
        $region32: #{tpu_custom_call.1} parent=27 // pred_fallthru
          _
        // Predicated region
        $region33: #{tpu_custom_call.1} parent=27 // pred_check
          %p657 = pneg %p92
        $region34: #{tpu_custom_call.1} parent=27 // pred_check_branch
          %659 = sbr.rel (%p657) target = $region36
        $region35: #{tpu_custom_call.1} parent=27 // pred_region
          %p660 = scmp.lt.s32.totalorder %s41, 1
          %s661 = scalar_select %p660, %s41, 1
          %s662 = scalar_lea.vmem %s1, %s661
        $region36: #{tpu_custom_call.1} parent=27 // pred_fallthru
          _
        // Predicated region
        $region37: #{tpu_custom_call.1} parent=27 // pred_check
          %p663 = pneg %p139
        $region38: #{tpu_custom_call.1} parent=27 // pred_check_branch
          %665 = sbr.rel (%p663) target = $region40
        $region39: #{tpu_custom_call.1} parent=27 // pred_region
          %p666 = scmp.lt.s32.totalorder %s42, 1
          %s667 = scalar_select %p666, %s42, 1
          %s668 = scalar_lea.vmem %s3, %s667
        $region40: #{tpu_custom_call.1} parent=27 // pred_fallthru
          _
        // Predicated region
        $region41: #{tpu_custom_call.1} parent=27 // pred_check
          %p669 = pneg %p165
        $region42: #{tpu_custom_call.1} parent=27 // pred_check_branch
          %671 = sbr.rel (%p669) target = $region44
        $region43: #{tpu_custom_call.1} parent=27 // pred_region
          %p672 = scmp.lt.s32.totalorder %s42, 1
          %s673 = scalar_select %p672, %s42, 1
          %s674 = scalar_lea.vmem %s4, %s673
        $region44: #{tpu_custom_call.1} parent=27 // pred_fallthru
          _
        // Predicated region
        $region45: #{tpu_custom_call.1} parent=27 // pred_check
          %p675 = pneg %p191
        $region46: #{tpu_custom_call.1} parent=27 // pred_check_branch
          %677 = sbr.rel (%p675) target = $region48
        $region47: #{tpu_custom_call.1} parent=27 // pred_region
          %p678 = scmp.lt.s32.totalorder %s42, 1
          %s679 = scalar_select %p678, %s42, 1
          %s680 = smul.addr %s679, 4
          %s681 = smul.addr %s680, 4
          %s682 = scalar_lea.vmem %s5, %s681
        $region48: #{tpu_custom_call.1} parent=27 // pred_fallthru
          _
        // Predicated region
        $region49: #{tpu_custom_call.1} parent=27 // pred_check
          %p683 = pneg %p217
        $region50: #{tpu_custom_call.1} parent=27 // pred_check_branch
          %685 = sbr.rel (%p683) target = $region52
        $region51: #{tpu_custom_call.1} parent=27 // pred_region
          %p686 = scmp.lt.s32.totalorder %s42, 1
          %s687 = scalar_select %p686, %s42, 1
          %s688 = scalar_lea.vmem %s6, %s687
        $region52: #{tpu_custom_call.1} parent=27 // pred_fallthru
          _
        // Predicated region
        $region53: #{tpu_custom_call.1} parent=27 // pred_check
          %p689 = pneg %p243
        $region54: #{tpu_custom_call.1} parent=27 // pred_check_branch
          %691 = sbr.rel (%p689) target = $region56
        $region55: #{tpu_custom_call.1} parent=27 // pred_region
          %p692 = scmp.lt.s32.totalorder %s42, 1
          %s693 = scalar_select %p692, %s42, 1
          %s694 = smul.addr %s693, 4
          %s695 = smul.addr %s694, 4
          %s696 = scalar_lea.vmem %s7, %s695
        $region56: #{tpu_custom_call.1} parent=27 // pred_fallthru
          _
        // Predicated region
        $region57: #{tpu_custom_call.1} parent=27 // pred_check
          %p697 = pneg %p269
        $region58: #{tpu_custom_call.1} parent=27 // pred_check_branch
          %699 = sbr.rel (%p697) target = $region60
        $region59: #{tpu_custom_call.1} parent=27 // pred_region
          %p700 = scmp.lt.s32.totalorder %s42, 1
          %s701 = scalar_select %p700, %s42, 1
          %s702 = scalar_lea.vmem %s8, %s701
        $region60: #{tpu_custom_call.1} parent=27 // pred_fallthru
          _
        // Predicated region
        $region61: #{tpu_custom_call.1} parent=27 // pred_check
          %p703 = pneg %p295
        $region62: #{tpu_custom_call.1} parent=27 // pred_check_branch
          %705 = sbr.rel (%p703) target = $region64
        $region63: #{tpu_custom_call.1} parent=27 // pred_region
          %p706 = scmp.lt.s32.totalorder %s42, 1
          %s707 = scalar_select %p706, %s42, 1
          %s708 = smul.addr %s707, 4
          %s709 = smul.addr %s708, 4
          %s710 = scalar_lea.vmem %s9, %s709
        $region64: #{tpu_custom_call.1} parent=27 // pred_fallthru
          _
        // Predicated region
        $region65: #{tpu_custom_call.1} parent=27 // pred_check
          %p711 = pneg %p321
        $region66: #{tpu_custom_call.1} parent=27 // pred_check_branch
          %713 = sbr.rel (%p711) target = $region68
        $region67: #{tpu_custom_call.1} parent=27 // pred_region
          %p714 = scmp.lt.s32.totalorder %s42, 1
          %s715 = scalar_select %p714, %s42, 1
          %s716 = scalar_lea.vmem %s10, %s715
        $region68: #{tpu_custom_call.1} parent=27 // pred_fallthru
          _
        // Predicated region
        $region69: #{tpu_custom_call.1} parent=27 // pred_check
          %p717 = pneg %p347
        $region70: #{tpu_custom_call.1} parent=27 // pred_check_branch
          %719 = sbr.rel (%p717) target = $region72
        $region71: #{tpu_custom_call.1} parent=27 // pred_region
          %p720 = scmp.lt.s32.totalorder %s42, 1
          %s721 = scalar_select %p720, %s42, 1
          %s722 = smul.addr %s721, 4
          %s723 = smul.addr %s722, 4
          %s724 = scalar_lea.vmem %s11, %s723
        $region72: #{tpu_custom_call.1} parent=27 // pred_fallthru
          _
        // Predicated region
        $region73: #{tpu_custom_call.1} parent=27 // pred_check
          %p725 = pneg %p373
        $region74: #{tpu_custom_call.1} parent=27 // pred_check_branch
          %727 = sbr.rel (%p725) target = $region76
        $region75: #{tpu_custom_call.1} parent=27 // pred_region
          %p728 = scmp.lt.s32.totalorder %s42, 1
          %s729 = scalar_select %p728, %s42, 1
          %s730 = scalar_lea.vmem %s12, %s729
        $region76: #{tpu_custom_call.1} parent=27 // pred_fallthru
          _
        // Predicated region
        $region77: #{tpu_custom_call.1} parent=27 // pred_check
          %p731 = pneg %p399
        $region78: #{tpu_custom_call.1} parent=27 // pred_check_branch
          %733 = sbr.rel (%p731) target = $region80
        $region79: #{tpu_custom_call.1} parent=27 // pred_region
          %p734 = scmp.lt.s32.totalorder %s42, 1
          %s735 = scalar_select %p734, %s42, 1
          %s736 = scalar_lea.vmem %s13, %s735
        $region80: #{tpu_custom_call.1} parent=27 // pred_fallthru
          _
        // Predicated region
        $region81: #{tpu_custom_call.1} parent=27 // pred_check
          %p737 = pneg %p425
        $region82: #{tpu_custom_call.1} parent=27 // pred_check_branch
          %739 = sbr.rel (%p737) target = $region84
        $region83: #{tpu_custom_call.1} parent=27 // pred_region
          %p740 = scmp.lt.s32.totalorder %s42, 1
          %s741 = scalar_select %p740, %s42, 1
          %s742 = scalar_lea.vmem %s14, %s741
        $region84: #{tpu_custom_call.1} parent=27 // pred_fallthru
          _
        // Predicated region
        $region85: #{tpu_custom_call.1} parent=27 // pred_check
          %p743 = pneg %p451
        $region86: #{tpu_custom_call.1} parent=27 // pred_check_branch
          %745 = sbr.rel (%p743) target = $region88
        $region87: #{tpu_custom_call.1} parent=27 // pred_region
          %p746 = scmp.lt.s32.totalorder %s42, 1
          %s747 = scalar_select %p746, %s42, 1
          %s748 = smul.addr %s747, 4
          %s749 = smul.addr %s748, 4
          %s750 = scalar_lea.vmem %s15, %s749
        $region88: #{tpu_custom_call.1} parent=27 // pred_fallthru
          _
        // Predicated region
        $region89: #{tpu_custom_call.1} parent=27 // pred_check
          %p751 = pneg %p477
        $region90: #{tpu_custom_call.1} parent=27 // pred_check_branch
          %753 = sbr.rel (%p751) target = $region92
        $region91: #{tpu_custom_call.1} parent=27 // pred_region
          %p754 = scmp.lt.s32.totalorder %s42, 1
          %s755 = scalar_select %p754, %s42, 1
          %s756 = scalar_lea.vmem %s16, %s755
        $region92: #{tpu_custom_call.1} parent=27 // pred_fallthru
          _
        // Predicated region
        $region93: #{tpu_custom_call.1} parent=27 // pred_check
          %p757 = pneg %p503
        $region94: #{tpu_custom_call.1} parent=27 // pred_check_branch
          %759 = sbr.rel (%p757) target = $region96
        $region95: #{tpu_custom_call.1} parent=27 // pred_region
          %p760 = scmp.lt.s32.totalorder %s42, 1
          %s761 = scalar_select %p760, %s42, 1
          %s762 = smul.addr %s761, 16
          %s763 = smul.addr %s762, 4
          %s764 = scalar_lea.vmem %s17, %s763
        $region96: #{tpu_custom_call.1} parent=27 // pred_fallthru
          _
        // Predicated region
        $region97: #{tpu_custom_call.1} parent=27 // pred_check
          %p765 = pneg %p529
        $region98: #{tpu_custom_call.1} parent=27 // pred_check_branch
          %767 = sbr.rel (%p765) target = $region100
        $region99: #{tpu_custom_call.1} parent=27 // pred_region
          %p768 = scmp.lt.s32.totalorder %s42, 1
          %s769 = scalar_select %p768, %s42, 1
          %s770 = scalar_lea.vmem %s18, %s769
        $region100: #{tpu_custom_call.1} parent=27 // pred_fallthru
          _
      $region28: #{tpu_custom_call.1} parent=5 // pred_fallthru
        _
      %p771 = scmp.le.s32.totalorder 1, %s34
      %p772 = scmp.lt.s32.totalorder %s34, 5
      %p773 = pnand %p771, %p772
      %p774 = pneg %p773
      // Predicated region
      $region101: #{tpu_custom_call.1} parent=5 // pred_check
        _
      $region102: #{tpu_custom_call.1} parent=5 // pred_check_branch
        %776 = sbr.rel (%p773) target = $region104
      $region103: #{tpu_custom_call.1} parent=5 // pred_region
        %s777 = ssub.s32 %s34, 1
        %s778 = sand.u32 %s59, 1
        %s779 = scalar_lea.sflag [#allocation4], %s778
        %s780 = sand.u32 %s59, 1
        %s781 = smul.addr %s780, 8
        %s782 = scalar_lea.vmem [#allocation3], %s781
        // Predicated region
        $region105: #{tpu_custom_call.1} parent=103 // pred_check
          %p783 = pneg %p72
        $region106: #{tpu_custom_call.1} parent=103 // pred_check_branch
          %785 = sbr.rel (%p783) target = $region108
        $region107: #{tpu_custom_call.1} parent=103 // pred_region
          %786 = dma.done %s779, 128
        $region108: #{tpu_custom_call.1} parent=103 // pred_fallthru
          _
        // Predicated region
        $region109: #{tpu_custom_call.1} parent=103 // pred_check
          %p787 = pneg %p119
        $region110: #{tpu_custom_call.1} parent=103 // pred_check_branch
          %789 = sbr.rel (%p787) target = $region112
        $region111: #{tpu_custom_call.1} parent=103 // pred_region
          %790 = dma.done [#allocation7], 128
        $region112: #{tpu_custom_call.1} parent=103 // pred_fallthru
          _
        %s791 = sand.u32 %s59, 1
        %s792 = scalar_lea.sflag [#allocation4], %s791
        %s793 = sand.u32 %s59, 1
        %s794 = smul.addr %s793, 8
        %s795 = scalar_lea.vmem [#allocation3], %s794
        %p796 = pneg %p72
        %p797 = pneg %p69
        %p798 = scmp.lt.s32.totalorder %s43, 1
        %s799 = scalar_select %p798, %s43, 1
        %s800 = scalar_lea.vmem %s1, %s799
        %p801 = pneg %p98
        %p802 = pneg %p95
        %p803 = pneg %p119
        %p804 = pneg %p116
        %p805 = scmp.lt.s32.totalorder %s44, 1
        %s806 = scalar_select %p805, %s44, 1
        %s807 = scalar_lea.vmem %s3, %s806
        %p808 = pneg %p145
        %p809 = pneg %p142
        %p810 = scmp.lt.s32.totalorder %s44, 1
        %s811 = scalar_select %p810, %s44, 1
        %s812 = scalar_lea.vmem %s4, %s811
        %p813 = pneg %p171
        %p814 = pneg %p168
        %p815 = scmp.lt.s32.totalorder %s44, 1
        %s816 = scalar_select %p815, %s44, 1
        %s817 = smul.addr %s816, 4
        %s818 = smul.addr %s817, 4
        %s819 = scalar_lea.vmem %s5, %s818
        %p820 = pneg %p197
        %p821 = pneg %p194
        %p822 = scmp.lt.s32.totalorder %s44, 1
        %s823 = scalar_select %p822, %s44, 1
        %s824 = scalar_lea.vmem %s6, %s823
        %p825 = pneg %p223
        %p826 = pneg %p220
        %p827 = scmp.lt.s32.totalorder %s44, 1
        %s828 = scalar_select %p827, %s44, 1
        %s829 = smul.addr %s828, 4
        %s830 = smul.addr %s829, 4
        %s831 = scalar_lea.vmem %s7, %s830
        %p832 = pneg %p249
        %p833 = pneg %p246
        %p834 = scmp.lt.s32.totalorder %s44, 1
        %s835 = scalar_select %p834, %s44, 1
        %s836 = scalar_lea.vmem %s8, %s835
        %p837 = pneg %p275
        %p838 = pneg %p272
        %p839 = scmp.lt.s32.totalorder %s44, 1
        %s840 = scalar_select %p839, %s44, 1
        %s841 = smul.addr %s840, 4
        %s842 = smul.addr %s841, 4
        %s843 = scalar_lea.vmem %s9, %s842
        %p844 = pneg %p301
        %p845 = pneg %p298
        %p846 = scmp.lt.s32.totalorder %s44, 1
        %s847 = scalar_select %p846, %s44, 1
        %s848 = scalar_lea.vmem %s10, %s847
        %p849 = pneg %p327
        %p850 = pneg %p324
        %p851 = scmp.lt.s32.totalorder %s44, 1
        %s852 = scalar_select %p851, %s44, 1
        %s853 = smul.addr %s852, 4
        %s854 = smul.addr %s853, 4
        %s855 = scalar_lea.vmem %s11, %s854
        %p856 = pneg %p353
        %p857 = pneg %p350
        %p858 = scmp.lt.s32.totalorder %s44, 1
        %s859 = scalar_select %p858, %s44, 1
        %s860 = scalar_lea.vmem %s12, %s859
        %p861 = pneg %p379
        %p862 = pneg %p376
        %p863 = scmp.lt.s32.totalorder %s44, 1
        %s864 = scalar_select %p863, %s44, 1
        %s865 = scalar_lea.vmem %s13, %s864
        %p866 = pneg %p405
        %p867 = pneg %p402
        %p868 = scmp.lt.s32.totalorder %s44, 1
        %s869 = scalar_select %p868, %s44, 1
        %s870 = scalar_lea.vmem %s14, %s869
        %p871 = pneg %p431
        %p872 = pneg %p428
        %p873 = scmp.lt.s32.totalorder %s44, 1
        %s874 = scalar_select %p873, %s44, 1
        %s875 = smul.addr %s874, 4
        %s876 = smul.addr %s875, 4
        %s877 = scalar_lea.vmem %s15, %s876
        %p878 = pneg %p457
        %p879 = pneg %p454
        %p880 = scmp.lt.s32.totalorder %s44, 1
        %s881 = scalar_select %p880, %s44, 1
        %s882 = scalar_lea.vmem %s16, %s881
        %p883 = pneg %p483
        %p884 = pneg %p480
        %p885 = scmp.lt.s32.totalorder %s44, 1
        %s886 = scalar_select %p885, %s44, 1
        %s887 = smul.addr %s886, 16
        %s888 = smul.addr %s887, 4
        %s889 = scalar_lea.vmem %s17, %s888
        %p890 = pneg %p509
        %p891 = pneg %p506
        %p892 = scmp.lt.s32.totalorder %s44, 1
        %s893 = scalar_select %p892, %s44, 1
        %s894 = scalar_lea.vmem %s18, %s893
        %p895 = pneg %p535
        %p896 = pneg %p532
        %p897 = pneg %p556
        %p898 = pneg %p553
        %p899 = pneg %p577
        %p900 = pneg %p574
        %p901 = pneg %p603
        %p902 = pneg %p600
        %s903 = sand.u32 %s590, 1
        %s904 = scalar_lea.sflag [#allocation5], %s903
        %s905 = sand.u32 %s590, 1
        %s906 = smul.addr %s905, 8
        %s907 = scalar_lea.vmem [#allocation8], %s906
        %p908 = scmp.lt.s32.totalorder %s43, 1
        %s909 = scalar_select %p908, %s43, 1
        %s910 = scalar_lea.vmem %s1, %s909
        %p911 = scmp.lt.s32.totalorder %s44, 1
        %s912 = scalar_select %p911, %s44, 1
        %s913 = scalar_lea.vmem %s3, %s912
        %p914 = scmp.lt.s32.totalorder %s44, 1
        %s915 = scalar_select %p914, %s44, 1
        %s916 = scalar_lea.vmem %s4, %s915
        %p917 = scmp.lt.s32.totalorder %s44, 1
        %s918 = scalar_select %p917, %s44, 1
        %s919 = smul.addr %s918, 4
        %s920 = smul.addr %s919, 4
        %s921 = scalar_lea.vmem %s5, %s920
        %p922 = scmp.lt.s32.totalorder %s44, 1
        %s923 = scalar_select %p922, %s44, 1
        %s924 = scalar_lea.vmem %s6, %s923
        %p925 = scmp.lt.s32.totalorder %s44, 1
        %s926 = scalar_select %p925, %s44, 1
        %s927 = smul.addr %s926, 4
        %s928 = smul.addr %s927, 4
        %s929 = scalar_lea.vmem %s7, %s928
        %p930 = scmp.lt.s32.totalorder %s44, 1
        %s931 = scalar_select %p930, %s44, 1
        %s932 = scalar_lea.vmem %s8, %s931
        %p933 = scmp.lt.s32.totalorder %s44, 1
        %s934 = scalar_select %p933, %s44, 1
        %s935 = smul.addr %s934, 4
        %s936 = smul.addr %s935, 4
        %s937 = scalar_lea.vmem %s9, %s936
        %p938 = scmp.lt.s32.totalorder %s44, 1
        %s939 = scalar_select %p938, %s44, 1
        %s940 = scalar_lea.vmem %s10, %s939
        %p941 = scmp.lt.s32.totalorder %s44, 1
        %s942 = scalar_select %p941, %s44, 1
        %s943 = smul.addr %s942, 4
        %s944 = smul.addr %s943, 4
        %s945 = scalar_lea.vmem %s11, %s944
        %p946 = scmp.lt.s32.totalorder %s44, 1
        %s947 = scalar_select %p946, %s44, 1
        %s948 = scalar_lea.vmem %s12, %s947
        %p949 = scmp.lt.s32.totalorder %s44, 1
        %s950 = scalar_select %p949, %s44, 1
        %s951 = scalar_lea.vmem %s13, %s950
        %p952 = scmp.lt.s32.totalorder %s44, 1
        %s953 = scalar_select %p952, %s44, 1
        %s954 = scalar_lea.vmem %s14, %s953
        %p955 = scmp.lt.s32.totalorder %s44, 1
        %s956 = scalar_select %p955, %s44, 1
        %s957 = smul.addr %s956, 4
        %s958 = smul.addr %s957, 4
        %s959 = scalar_lea.vmem %s15, %s958
        %p960 = scmp.lt.s32.totalorder %s44, 1
        %s961 = scalar_select %p960, %s44, 1
        %s962 = scalar_lea.vmem %s16, %s961
        %p963 = scmp.lt.s32.totalorder %s44, 1
        %s964 = scalar_select %p963, %s44, 1
        %s965 = smul.addr %s964, 16
        %s966 = smul.addr %s965, 4
        %s967 = scalar_lea.vmem %s17, %s966
        %p968 = scmp.lt.s32.totalorder %s44, 1
        %s969 = scalar_select %p968, %s44, 1
        %s970 = scalar_lea.vmem %s18, %s969
        %p972 = scmp.eq.s32.totalorder %s44, 0
        // Predicated region
        $region113: #{tpu_custom_call.1} parent=103 // pred_check
          %p973 = pneg %p972
        $region114: #{tpu_custom_call.1} parent=103 // pred_check_branch
          %975 = sbr.rel (%p973) target = $region116
        $region115: #{tpu_custom_call.1} parent=103 // pred_region
          %v976 = vld [vmem:[%s782] sm:$0xff]
          %v977 = vmul.f32 %v976, 5.656854
          %v978 = vld [vmem:[#allocation6] sm:$0xff]
          %v979 = vadd.f32 %v977, %v978
          %vm980 = vcmask 261120
          %981 = vst.msk [vmem:[#allocation2] sm:$0xff] %vm980, %v979
        $region116: #{tpu_custom_call.1} parent=103 // pred_fallthru
          _
        %v982 = vld [vmem:[#allocation2] sm:$0xff]
        %v983 = vld [vmem:[%s910] sm:$0x1]
        %v984 = vsub.f32 %v983, 1.0
        %v985 = vmul.f32 %v984, 1e+09
        %v986 = vld [vmem:[%s913] sm:$0x1]
        %v987 = vld [vmem:[%s916] sm:$0x1]
        %vm988 = vcmask 261120
        %v989 = vsel %vm988, %v982, 0.0
        %990 = vadd.xlane.f32.xlu0 %v989
        %v991 = vpop.xlane.xlu0 %990
        %v992 = vrcp.pop 32.0
        %v993 = vmul.f32 %v991, %v992
        %v994 = vsub.f32 %v982, %v993
        %v995 = vmul.f32 %v994, %v994
        %v996 = vsel %vm988, %v995, 0.0
        %997 = vadd.xlane.f32.xlu0 %v996
        %v998 = vpop.xlane.xlu0 %997
        %v999 = vmul.f32 %v998, 0.032258064
        %v1000 = vrsqrt.pop %v999
        %v1001 = vmul.f32 %v999, %v1000
        %vm1002 = vcmp.eq.f32.partialorder %v999, inf
        %v1003 = vsel %vm1002, %v999, %v1001
        %vm1004 = vcmp.eq.f32.partialorder %v999, 0.0
        %v1005 = vand.u32 %v999, 2147483648
        %v1006 = vsel %vm1004, %v1005, %v1003
        %v1007 = vadd.f32 %v1006, 1e-06
        %v1008 = vrcp.pop %v1007
        %v1009 = vmul.f32 1.0, %v1008
        %v1011 = vlaneseq
        %v1012 = vshrl.u32 %v1011, 7
        %v1013 = vsub.s32 0, %v1012
        %v1014 = vrot.slane %v986, %v1013
        %v1016 = vmul.f32 %v1014, %v994
        %v1017 = vmul.f32 %v1016, %v1009
        %v1019 = vlaneseq
        %v1020 = vshrl.u32 %v1019, 7
        %v1021 = vsub.s32 0, %v1020
        %v1022 = vrot.slane %v987, %v1021
        %v1024 = vadd.f32 %v1017, %v1022
        %v1025 = vpack.c.bf16 %v1024, %v1024
        %v1026 = vld [vmem:[%s921] sm:$0xf]
        %v1027 = vld [vmem:[%s921 + $0x4] sm:$0xf]
        %v1028 = vld [vmem:[%s921 + $0x8] sm:$0xf]
        %v1029 = vld [vmem:[%s921 + $0xc] sm:$0xf]
        %v1030 = vld [vmem:[%s924] sm:$0x1]
        %v1032 = vlaneseq
        %v1033 = vshrl.u32 %v1032, 7
        %v1034 = vsub.s32 0, %v1033
        %v1035 = vrot.slane %v1030, %v1034
        %v1041 = vunpack.c.l.b16 %v1026
        %v1042 = vunpack.c.l.b16 %v1027
        %v1043 = vunpack.c.l.b16 %v1028
        %v1044 = vunpack.c.l.b16 %v1029
        %v1045 = vpack.c.b16 %v1042, %v1041
        %v1046 = vpack.c.b16 %v1044, %v1043
        %v1050 = vsel %vm988, %v1025, 0
        %1052 = vmatprep.subr.bf16.mxu0 0
        %1053 = vmatpush1.bf16.msra.mxu0 %v1045
        %1054 = vmatprep.subr.bf16.mxu0 0
        %1055 = vmatpush1.bf16.msra.mxu0 %v1046
        %1056 = vmatprep.subr.bf16.mxu0 0
        %1057 = vmatpush1.bf16.msra.mxu0 0
        %1058 = vmatprep.subr.bf16.mxu0 0
        %1059 = vmatpush1.bf16.msra.mxu0 0
        %1060 = vmatprep.subr.bf16.mxu0 0
        %1061 = vmatpush1.bf16.msra.mxu0 0
        %1062 = vmatprep.subr.bf16.mxu0 0
        %1063 = vmatpush1.bf16.msra.mxu0 0
        %1064 = vmatprep.subr.bf16.mxu0 0
        %1065 = vmatpush1.bf16.msra.mxu0 0
        %1066 = vmatprep.subr.bf16.mxu0 0
        %1067 = vmatpush1.bf16.msra.mxu0 0
        %1068 = vmatprep.subr.bf16.mxu0 0
        %1069 = vmatpush1.bf16.msra.mxu0 0
        %1070 = vmatprep.subr.bf16.mxu0 0
        %1071 = vmatpush1.bf16.msra.mxu0 0
        %1072 = vmatprep.subr.bf16.mxu0 0
        %1073 = vmatpush1.bf16.msra.mxu0 0
        %1074 = vmatprep.subr.bf16.mxu0 0
        %1075 = vmatpush1.bf16.msra.mxu0 0
        %1076 = vmatprep.subr.bf16.mxu0 0
        %1077 = vmatpush1.bf16.msra.mxu0 0
        %1078 = vmatprep.subr.bf16.mxu0 0
        %1079 = vmatpush1.bf16.msra.mxu0 0
        %1080 = vmatprep.subr.bf16.mxu0 0
        %1081 = vmatpush1.bf16.msra.mxu0 0
        %1082 = vmatprep.subr.bf16.mxu0 0
        %1083 = vmatpush1.bf16.msra.mxu0 0
        %1084 = vmatprep.mubr.bf16.mxu0 0
        %1085 = vmatmul.mubr.bf16.gmra.mrb[0].mxu0 %v1050
        %v1086 = vpop.f32.mrb[0].mxu0
        %v1087 = vadd.f32 %v1035, %v1086
        %v1088 = vpop.f32.mrb[0].mxu0
        %v1089 = vpop.f32.mrb[0].mxu0
        %v1090 = vpop.f32.mrb[0].mxu0
        %1091 = vdwg.mxu0
        %v1092 = vld [vmem:[%s929] sm:$0xf]
        %v1093 = vld [vmem:[%s929 + $0x4] sm:$0xf]
        %v1094 = vld [vmem:[%s929 + $0x8] sm:$0xf]
        %v1095 = vld [vmem:[%s929 + $0xc] sm:$0xf]
        %v1096 = vld [vmem:[%s932] sm:$0x1]
        %v1098 = vlaneseq
        %v1099 = vshrl.u32 %v1098, 7
        %v1100 = vsub.s32 0, %v1099
        %v1101 = vrot.slane %v1096, %v1100
        %v1107 = vunpack.c.l.b16 %v1092
        %v1108 = vunpack.c.l.b16 %v1093
        %v1109 = vunpack.c.l.b16 %v1094
        %v1110 = vunpack.c.l.b16 %v1095
        %v1111 = vpack.c.b16 %v1108, %v1107
        %v1112 = vpack.c.b16 %v1110, %v1109
        %1115 = vmatprep.subr.bf16.mxu0 0
        %1116 = vmatpush1.bf16.msra.mxu0 %v1111
        %1117 = vmatprep.subr.bf16.mxu0 0
        %1118 = vmatpush1.bf16.msra.mxu0 %v1112
        %1119 = vmatprep.subr.bf16.mxu0 0
        %1120 = vmatpush1.bf16.msra.mxu0 0
        %1121 = vmatprep.subr.bf16.mxu0 0
        %1122 = vmatpush1.bf16.msra.mxu0 0
        %1123 = vmatprep.subr.bf16.mxu0 0
        %1124 = vmatpush1.bf16.msra.mxu0 0
        %1125 = vmatprep.subr.bf16.mxu0 0
        %1126 = vmatpush1.bf16.msra.mxu0 0
        %1127 = vmatprep.subr.bf16.mxu0 0
        %1128 = vmatpush1.bf16.msra.mxu0 0
        %1129 = vmatprep.subr.bf16.mxu0 0
        %1130 = vmatpush1.bf16.msra.mxu0 0
        %1131 = vmatprep.subr.bf16.mxu0 0
        %1132 = vmatpush1.bf16.msra.mxu0 0
        %1133 = vmatprep.subr.bf16.mxu0 0
        %1134 = vmatpush1.bf16.msra.mxu0 0
        %1135 = vmatprep.subr.bf16.mxu0 0
        %1136 = vmatpush1.bf16.msra.mxu0 0
        %1137 = vmatprep.subr.bf16.mxu0 0
        %1138 = vmatpush1.bf16.msra.mxu0 0
        %1139 = vmatprep.subr.bf16.mxu0 0
        %1140 = vmatpush1.bf16.msra.mxu0 0
        %1141 = vmatprep.subr.bf16.mxu0 0
        %1142 = vmatpush1.bf16.msra.mxu0 0
        %1143 = vmatprep.subr.bf16.mxu0 0
        %1144 = vmatpush1.bf16.msra.mxu0 0
        %1145 = vmatprep.subr.bf16.mxu0 0
        %1146 = vmatpush1.bf16.msra.mxu0 0
        %1147 = vmatprep.mubr.bf16.mxu0 0
        %1148 = vmatmul.mubr.bf16.gmra.mrb[0].mxu0 %v1050
        %v1149 = vpop.f32.mrb[0].mxu0
        %v1150 = vadd.f32 %v1101, %v1149
        %v1151 = vpop.f32.mrb[0].mxu0
        %v1152 = vpop.f32.mrb[0].mxu0
        %v1153 = vpop.f32.mrb[0].mxu0
        %1154 = vdwg.mxu0
        %v1155 = vld [vmem:[%s937] sm:$0xf]
        %v1156 = vld [vmem:[%s937 + $0x4] sm:$0xf]
        %v1157 = vld [vmem:[%s937 + $0x8] sm:$0xf]
        %v1158 = vld [vmem:[%s937 + $0xc] sm:$0xf]
        %v1159 = vld [vmem:[%s940] sm:$0x1]
        %v1161 = vlaneseq
        %v1162 = vshrl.u32 %v1161, 7
        %v1163 = vsub.s32 0, %v1162
        %v1164 = vrot.slane %v1159, %v1163
        %v1170 = vunpack.c.l.b16 %v1155
        %v1171 = vunpack.c.l.b16 %v1156
        %v1172 = vunpack.c.l.b16 %v1157
        %v1173 = vunpack.c.l.b16 %v1158
        %v1174 = vpack.c.b16 %v1171, %v1170
        %v1175 = vpack.c.b16 %v1173, %v1172
        %1178 = vmatprep.subr.bf16.mxu0 0
        %1179 = vmatpush1.bf16.msra.mxu0 %v1174
        %1180 = vmatprep.subr.bf16.mxu0 0
        %1181 = vmatpush1.bf16.msra.mxu0 %v1175
        %1182 = vmatprep.subr.bf16.mxu0 0
        %1183 = vmatpush1.bf16.msra.mxu0 0
        %1184 = vmatprep.subr.bf16.mxu0 0
        %1185 = vmatpush1.bf16.msra.mxu0 0
        %1186 = vmatprep.subr.bf16.mxu0 0
        %1187 = vmatpush1.bf16.msra.mxu0 0
        %1188 = vmatprep.subr.bf16.mxu0 0
        %1189 = vmatpush1.bf16.msra.mxu0 0
        %1190 = vmatprep.subr.bf16.mxu0 0
        %1191 = vmatpush1.bf16.msra.mxu0 0
        %1192 = vmatprep.subr.bf16.mxu0 0
        %1193 = vmatpush1.bf16.msra.mxu0 0
        %1194 = vmatprep.subr.bf16.mxu0 0
        %1195 = vmatpush1.bf16.msra.mxu0 0
        %1196 = vmatprep.subr.bf16.mxu0 0
        %1197 = vmatpush1.bf16.msra.mxu0 0
        %1198 = vmatprep.subr.bf16.mxu0 0
        %1199 = vmatpush1.bf16.msra.mxu0 0
        %1200 = vmatprep.subr.bf16.mxu0 0
        %1201 = vmatpush1.bf16.msra.mxu0 0
        %1202 = vmatprep.subr.bf16.mxu0 0
        %1203 = vmatpush1.bf16.msra.mxu0 0
        %1204 = vmatprep.subr.bf16.mxu0 0
        %1205 = vmatpush1.bf16.msra.mxu0 0
        %1206 = vmatprep.subr.bf16.mxu0 0
        %1207 = vmatpush1.bf16.msra.mxu0 0
        %1208 = vmatprep.subr.bf16.mxu0 0
        %1209 = vmatpush1.bf16.msra.mxu0 0
        %1210 = vmatprep.mubr.bf16.mxu0 0
        %1211 = vmatmul.mubr.bf16.gmra.mrb[0].mxu0 %v1050
        %v1212 = vpop.f32.mrb[0].mxu0
        %v1213 = vadd.f32 %v1164, %v1212
        %v1214 = vpop.f32.mrb[0].mxu0
        %v1215 = vpop.f32.mrb[0].mxu0
        %v1216 = vpop.f32.mrb[0].mxu0
        %1217 = vdwg.mxu0
        %v1218 = vmul.f32 %v1087, 0.35355338
        %1220 = vrot.lane.b32.xlu0 %v1218, 120
        %v1221 = vpop.permute.xlu0 %1220
        %1223 = vrot.lane.b32.xlu0 %v1218, 112
        %v1224 = vpop.permute.xlu0 %1223
        %1226 = vrot.lane.b32.xlu0 %v1218, 104
        %v1227 = vpop.permute.xlu0 %1226
        %v1229 = vcombine.low %v1218, %v1224
        %v1230 = vcombine.high %v1218, %v1224
        %v1232 = vunpack.c.l.s4 1983009808
        %v1233 = vunpack.c.0.s8 %v1232
        %v1234 = vlaneseq
        %v1235 = vshrl.u32 %v1234, 7
        %v1236 = vsub.s32 %v1233, %v1235
        %v1237 = vrot.slane %v1229, %v1236
        %v1239 = vunpack.c.l.s4 1983009808
        %v1240 = vunpack.c.0.s8 %v1239
        %v1241 = vlaneseq
        %v1242 = vshrl.u32 %v1241, 7
        %v1243 = vsub.s32 %v1240, %v1242
        %v1244 = vrot.slane %v1230, %v1243
        %v1245 = vcombine.low %v1221, %v1227
        %v1246 = vcombine.high %v1221, %v1227
        %v1248 = vunpack.c.l.s4 1983009808
        %v1249 = vunpack.c.0.s8 %v1248
        %v1250 = vlaneseq
        %v1251 = vshrl.u32 %v1250, 7
        %v1252 = vsub.s32 %v1249, %v1251
        %v1253 = vrot.slane %v1245, %v1252
        %v1255 = vunpack.c.l.s4 1983009808
        %v1256 = vunpack.c.0.s8 %v1255
        %v1257 = vlaneseq
        %v1258 = vshrl.u32 %v1257, 7
        %v1259 = vsub.s32 %v1256, %v1258
        %v1260 = vrot.slane %v1246, %v1259
        %v1261 = vcombine.low %v1237, %v1253
        %v1262 = vcombine.high %v1237, %v1253
        %v1264 = vunpack.c.l.s4 1934713408
        %v1265 = vunpack.c.0.s8 %v1264
        %v1266 = vlaneseq
        %v1267 = vshrl.u32 %v1266, 7
        %v1268 = vsub.s32 %v1265, %v1267
        %v1269 = vrot.slane %v1261, %v1268
        %v1271 = vunpack.c.l.s4 1934713408
        %v1272 = vunpack.c.0.s8 %v1271
        %v1273 = vlaneseq
        %v1274 = vshrl.u32 %v1273, 7
        %v1275 = vsub.s32 %v1272, %v1274
        %v1276 = vrot.slane %v1262, %v1275
        %v1277 = vcombine.low %v1244, %v1260
        %v1278 = vcombine.high %v1244, %v1260
        %v1280 = vunpack.c.l.s4 1934713408
        %v1281 = vunpack.c.0.s8 %v1280
        %v1282 = vlaneseq
        %v1283 = vshrl.u32 %v1282, 7
        %v1284 = vsub.s32 %v1281, %v1283
        %v1285 = vrot.slane %v1277, %v1284
        %v1287 = vunpack.c.l.s4 1934713408
        %v1288 = vunpack.c.0.s8 %v1287
        %v1289 = vlaneseq
        %v1290 = vshrl.u32 %v1289, 7
        %v1291 = vsub.s32 %v1288, %v1290
        %v1292 = vrot.slane %v1278, %v1291
        %v1293 = vcombine.high %v1269, 0.0
        %v1294 = vcombine.high %v1276, 0.0
        %v1295 = vcombine.high %v1285, 0.0
        %v1296 = vcombine.high %v1292, 0.0
        %v1297 = vcombine.low %v1269, %v1276
        %v1299 = vunpack.c.l.s4 1983009808
        %v1300 = vunpack.c.0.s8 %v1299
        %v1301 = vlaneseq
        %v1302 = vshrl.u32 %v1301, 7
        %v1303 = vsub.s32 %v1300, %v1302
        %v1304 = vrot.slane %v1297, %v1303
        %v1305 = vcombine.low %v1293, %v1294
        %v1307 = vunpack.c.l.s4 1983009808
        %v1308 = vunpack.c.0.s8 %v1307
        %v1309 = vlaneseq
        %v1310 = vshrl.u32 %v1309, 7
        %v1311 = vsub.s32 %v1308, %v1310
        %v1312 = vrot.slane %v1305, %v1311
        %v1313 = vcombine.low %v1285, %v1292
        %v1315 = vunpack.c.l.s4 1983009808
        %v1316 = vunpack.c.0.s8 %v1315
        %v1317 = vlaneseq
        %v1318 = vshrl.u32 %v1317, 7
        %v1319 = vsub.s32 %v1316, %v1318
        %v1320 = vrot.slane %v1313, %v1319
        %v1321 = vcombine.low %v1295, %v1296
        %v1323 = vunpack.c.l.s4 1983009808
        %v1324 = vunpack.c.0.s8 %v1323
        %v1325 = vlaneseq
        %v1326 = vshrl.u32 %v1325, 7
        %v1327 = vsub.s32 %v1324, %v1326
        %v1328 = vrot.slane %v1321, %v1327
        %v1329 = vcombine.low %v1304, %v1312
        %v1330 = vcombine.high %v1304, %v1312
        %v1332 = vunpack.c.l.s4 1934713408
        %v1333 = vunpack.c.0.s8 %v1332
        %v1334 = vlaneseq
        %v1335 = vshrl.u32 %v1334, 7
        %v1336 = vsub.s32 %v1333, %v1335
        %v1337 = vrot.slane %v1329, %v1336
        %v1339 = vunpack.c.l.s4 1934713408
        %v1340 = vunpack.c.0.s8 %v1339
        %v1341 = vlaneseq
        %v1342 = vshrl.u32 %v1341, 7
        %v1343 = vsub.s32 %v1340, %v1342
        %v1344 = vrot.slane %v1330, %v1343
        %v1345 = vcombine.low %v1320, %v1328
        %v1346 = vcombine.high %v1320, %v1328
        %v1348 = vunpack.c.l.s4 1934713408
        %v1349 = vunpack.c.0.s8 %v1348
        %v1350 = vlaneseq
        %v1351 = vshrl.u32 %v1350, 7
        %v1352 = vsub.s32 %v1349, %v1351
        %v1353 = vrot.slane %v1345, %v1352
        %v1355 = vunpack.c.l.s4 1934713408
        %v1356 = vunpack.c.0.s8 %v1355
        %v1357 = vlaneseq
        %v1358 = vshrl.u32 %v1357, 7
        %v1359 = vsub.s32 %v1356, %v1358
        %v1360 = vrot.slane %v1346, %v1359
        %v1361 = vcombine.low %v1337, %v1353
        %v1362 = vcombine.high %v1337, %v1353
        %v1363 = vcombine.low %v1344, %v1360
        %v1364 = vcombine.high %v1344, %v1360
        %v1365 = vpack.c.bf16 %v1361, %v1361
        %v1366 = vpack.c.bf16 %v1362, %v1362
        %v1367 = vpack.c.bf16 %v1363, %v1363
        %v1368 = vpack.c.bf16 %v1364, %v1364
        %1370 = vrot.lane.b32.xlu0 %v1150, 120
        %v1371 = vpop.permute.xlu0 %1370
        %1373 = vrot.lane.b32.xlu0 %v1150, 112
        %v1374 = vpop.permute.xlu0 %1373
        %1376 = vrot.lane.b32.xlu0 %v1150, 104
        %v1377 = vpop.permute.xlu0 %1376
        %v1379 = vcombine.low %v1150, %v1374
        %v1380 = vcombine.high %v1150, %v1374
        %v1382 = vunpack.c.l.s4 1983009808
        %v1383 = vunpack.c.0.s8 %v1382
        %v1384 = vlaneseq
        %v1385 = vshrl.u32 %v1384, 7
        %v1386 = vsub.s32 %v1383, %v1385
        %v1387 = vrot.slane %v1379, %v1386
        %v1389 = vunpack.c.l.s4 1983009808
        %v1390 = vunpack.c.0.s8 %v1389
        %v1391 = vlaneseq
        %v1392 = vshrl.u32 %v1391, 7
        %v1393 = vsub.s32 %v1390, %v1392
        %v1394 = vrot.slane %v1380, %v1393
        %v1395 = vcombine.low %v1371, %v1377
        %v1396 = vcombine.high %v1371, %v1377
        %v1398 = vunpack.c.l.s4 1983009808
        %v1399 = vunpack.c.0.s8 %v1398
        %v1400 = vlaneseq
        %v1401 = vshrl.u32 %v1400, 7
        %v1402 = vsub.s32 %v1399, %v1401
        %v1403 = vrot.slane %v1395, %v1402
        %v1405 = vunpack.c.l.s4 1983009808
        %v1406 = vunpack.c.0.s8 %v1405
        %v1407 = vlaneseq
        %v1408 = vshrl.u32 %v1407, 7
        %v1409 = vsub.s32 %v1406, %v1408
        %v1410 = vrot.slane %v1396, %v1409
        %v1411 = vcombine.low %v1387, %v1403
        %v1412 = vcombine.high %v1387, %v1403
        %v1414 = vunpack.c.l.s4 1934713408
        %v1415 = vunpack.c.0.s8 %v1414
        %v1416 = vlaneseq
        %v1417 = vshrl.u32 %v1416, 7
        %v1418 = vsub.s32 %v1415, %v1417
        %v1419 = vrot.slane %v1411, %v1418
        %v1421 = vunpack.c.l.s4 1934713408
        %v1422 = vunpack.c.0.s8 %v1421
        %v1423 = vlaneseq
        %v1424 = vshrl.u32 %v1423, 7
        %v1425 = vsub.s32 %v1422, %v1424
        %v1426 = vrot.slane %v1412, %v1425
        %v1427 = vcombine.low %v1394, %v1410
        %v1428 = vcombine.high %v1394, %v1410
        %v1430 = vunpack.c.l.s4 1934713408
        %v1431 = vunpack.c.0.s8 %v1430
        %v1432 = vlaneseq
        %v1433 = vshrl.u32 %v1432, 7
        %v1434 = vsub.s32 %v1431, %v1433
        %v1435 = vrot.slane %v1427, %v1434
        %v1437 = vunpack.c.l.s4 1934713408
        %v1438 = vunpack.c.0.s8 %v1437
        %v1439 = vlaneseq
        %v1440 = vshrl.u32 %v1439, 7
        %v1441 = vsub.s32 %v1438, %v1440
        %v1442 = vrot.slane %v1428, %v1441
        %v1443 = vcombine.high %v1419, 0.0
        %v1444 = vcombine.high %v1426, 0.0
        %v1445 = vcombine.high %v1435, 0.0
        %v1446 = vcombine.high %v1442, 0.0
        %v1447 = vcombine.low %v1419, %v1426
        %v1449 = vunpack.c.l.s4 1983009808
        %v1450 = vunpack.c.0.s8 %v1449
        %v1451 = vlaneseq
        %v1452 = vshrl.u32 %v1451, 7
        %v1453 = vsub.s32 %v1450, %v1452
        %v1454 = vrot.slane %v1447, %v1453
        %v1455 = vcombine.low %v1443, %v1444
        %v1457 = vunpack.c.l.s4 1983009808
        %v1458 = vunpack.c.0.s8 %v1457
        %v1459 = vlaneseq
        %v1460 = vshrl.u32 %v1459, 7
        %v1461 = vsub.s32 %v1458, %v1460
        %v1462 = vrot.slane %v1455, %v1461
        %v1463 = vcombine.low %v1435, %v1442
        %v1465 = vunpack.c.l.s4 1983009808
        %v1466 = vunpack.c.0.s8 %v1465
        %v1467 = vlaneseq
        %v1468 = vshrl.u32 %v1467, 7
        %v1469 = vsub.s32 %v1466, %v1468
        %v1470 = vrot.slane %v1463, %v1469
        %v1471 = vcombine.low %v1445, %v1446
        %v1473 = vunpack.c.l.s4 1983009808
        %v1474 = vunpack.c.0.s8 %v1473
        %v1475 = vlaneseq
        %v1476 = vshrl.u32 %v1475, 7
        %v1477 = vsub.s32 %v1474, %v1476
        %v1478 = vrot.slane %v1471, %v1477
        %v1479 = vcombine.low %v1454, %v1462
        %v1480 = vcombine.high %v1454, %v1462
        %v1482 = vunpack.c.l.s4 1934713408
        %v1483 = vunpack.c.0.s8 %v1482
        %v1484 = vlaneseq
        %v1485 = vshrl.u32 %v1484, 7
        %v1486 = vsub.s32 %v1483, %v1485
        %v1487 = vrot.slane %v1479, %v1486
        %v1489 = vunpack.c.l.s4 1934713408
        %v1490 = vunpack.c.0.s8 %v1489
        %v1491 = vlaneseq
        %v1492 = vshrl.u32 %v1491, 7
        %v1493 = vsub.s32 %v1490, %v1492
        %v1494 = vrot.slane %v1480, %v1493
        %v1495 = vcombine.low %v1470, %v1478
        %v1496 = vcombine.high %v1470, %v1478
        %v1498 = vunpack.c.l.s4 1934713408
        %v1499 = vunpack.c.0.s8 %v1498
        %v1500 = vlaneseq
        %v1501 = vshrl.u32 %v1500, 7
        %v1502 = vsub.s32 %v1499, %v1501
        %v1503 = vrot.slane %v1495, %v1502
        %v1505 = vunpack.c.l.s4 1934713408
        %v1506 = vunpack.c.0.s8 %v1505
        %v1507 = vlaneseq
        %v1508 = vshrl.u32 %v1507, 7
        %v1509 = vsub.s32 %v1506, %v1508
        %v1510 = vrot.slane %v1496, %v1509
        %v1511 = vcombine.low %v1487, %v1503
        %v1512 = vcombine.high %v1487, %v1503
        %v1513 = vcombine.low %v1494, %v1510
        %v1514 = vcombine.high %v1494, %v1510
        %v1515 = vpack.c.bf16 %v1511, %v1511
        %v1516 = vpack.c.bf16 %v1512, %v1512
        %v1517 = vpack.c.bf16 %v1513, %v1513
        %v1518 = vpack.c.bf16 %v1514, %v1514
        %1520 = vrot.lane.b32.xlu0 %v1213, 120
        %v1521 = vpop.permute.xlu0 %1520
        %1523 = vrot.lane.b32.xlu0 %v1213, 112
        %v1524 = vpop.permute.xlu0 %1523
        %1526 = vrot.lane.b32.xlu0 %v1213, 104
        %v1527 = vpop.permute.xlu0 %1526
        %v1529 = vcombine.low %v1213, %v1524
        %v1530 = vcombine.high %v1213, %v1524
        %v1532 = vunpack.c.l.s4 1983009808
        %v1533 = vunpack.c.0.s8 %v1532
        %v1534 = vlaneseq
        %v1535 = vshrl.u32 %v1534, 7
        %v1536 = vsub.s32 %v1533, %v1535
        %v1537 = vrot.slane %v1529, %v1536
        %v1539 = vunpack.c.l.s4 1983009808
        %v1540 = vunpack.c.0.s8 %v1539
        %v1541 = vlaneseq
        %v1542 = vshrl.u32 %v1541, 7
        %v1543 = vsub.s32 %v1540, %v1542
        %v1544 = vrot.slane %v1530, %v1543
        %v1545 = vcombine.low %v1521, %v1527
        %v1546 = vcombine.high %v1521, %v1527
        %v1548 = vunpack.c.l.s4 1983009808
        %v1549 = vunpack.c.0.s8 %v1548
        %v1550 = vlaneseq
        %v1551 = vshrl.u32 %v1550, 7
        %v1552 = vsub.s32 %v1549, %v1551
        %v1553 = vrot.slane %v1545, %v1552
        %v1555 = vunpack.c.l.s4 1983009808
        %v1556 = vunpack.c.0.s8 %v1555
        %v1557 = vlaneseq
        %v1558 = vshrl.u32 %v1557, 7
        %v1559 = vsub.s32 %v1556, %v1558
        %v1560 = vrot.slane %v1546, %v1559
        %v1561 = vcombine.low %v1537, %v1553
        %v1562 = vcombine.high %v1537, %v1553
        %v1564 = vunpack.c.l.s4 1934713408
        %v1565 = vunpack.c.0.s8 %v1564
        %v1566 = vlaneseq
        %v1567 = vshrl.u32 %v1566, 7
        %v1568 = vsub.s32 %v1565, %v1567
        %v1569 = vrot.slane %v1561, %v1568
        %v1571 = vunpack.c.l.s4 1934713408
        %v1572 = vunpack.c.0.s8 %v1571
        %v1573 = vlaneseq
        %v1574 = vshrl.u32 %v1573, 7
        %v1575 = vsub.s32 %v1572, %v1574
        %v1576 = vrot.slane %v1562, %v1575
        %v1577 = vcombine.low %v1544, %v1560
        %v1578 = vcombine.high %v1544, %v1560
        %v1580 = vunpack.c.l.s4 1934713408
        %v1581 = vunpack.c.0.s8 %v1580
        %v1582 = vlaneseq
        %v1583 = vshrl.u32 %v1582, 7
        %v1584 = vsub.s32 %v1581, %v1583
        %v1585 = vrot.slane %v1577, %v1584
        %v1587 = vunpack.c.l.s4 1934713408
        %v1588 = vunpack.c.0.s8 %v1587
        %v1589 = vlaneseq
        %v1590 = vshrl.u32 %v1589, 7
        %v1591 = vsub.s32 %v1588, %v1590
        %v1592 = vrot.slane %v1578, %v1591
        %v1593 = vcombine.high %v1569, 0.0
        %v1594 = vcombine.high %v1576, 0.0
        %v1595 = vcombine.high %v1585, 0.0
        %v1596 = vcombine.high %v1592, 0.0
        %v1597 = vcombine.low %v1569, %v1576
        %v1599 = vunpack.c.l.s4 1983009808
        %v1600 = vunpack.c.0.s8 %v1599
        %v1601 = vlaneseq
        %v1602 = vshrl.u32 %v1601, 7
        %v1603 = vsub.s32 %v1600, %v1602
        %v1604 = vrot.slane %v1597, %v1603
        %v1605 = vcombine.low %v1593, %v1594
        %v1607 = vunpack.c.l.s4 1983009808
        %v1608 = vunpack.c.0.s8 %v1607
        %v1609 = vlaneseq
        %v1610 = vshrl.u32 %v1609, 7
        %v1611 = vsub.s32 %v1608, %v1610
        %v1612 = vrot.slane %v1605, %v1611
        %v1613 = vcombine.low %v1585, %v1592
        %v1615 = vunpack.c.l.s4 1983009808
        %v1616 = vunpack.c.0.s8 %v1615
        %v1617 = vlaneseq
        %v1618 = vshrl.u32 %v1617, 7
        %v1619 = vsub.s32 %v1616, %v1618
        %v1620 = vrot.slane %v1613, %v1619
        %v1621 = vcombine.low %v1595, %v1596
        %v1623 = vunpack.c.l.s4 1983009808
        %v1624 = vunpack.c.0.s8 %v1623
        %v1625 = vlaneseq
        %v1626 = vshrl.u32 %v1625, 7
        %v1627 = vsub.s32 %v1624, %v1626
        %v1628 = vrot.slane %v1621, %v1627
        %v1629 = vcombine.low %v1604, %v1612
        %v1630 = vcombine.high %v1604, %v1612
        %v1632 = vunpack.c.l.s4 1934713408
        %v1633 = vunpack.c.0.s8 %v1632
        %v1634 = vlaneseq
        %v1635 = vshrl.u32 %v1634, 7
        %v1636 = vsub.s32 %v1633, %v1635
        %v1637 = vrot.slane %v1629, %v1636
        %v1639 = vunpack.c.l.s4 1934713408
        %v1640 = vunpack.c.0.s8 %v1639
        %v1641 = vlaneseq
        %v1642 = vshrl.u32 %v1641, 7
        %v1643 = vsub.s32 %v1640, %v1642
        %v1644 = vrot.slane %v1630, %v1643
        %v1645 = vcombine.low %v1620, %v1628
        %v1646 = vcombine.high %v1620, %v1628
        %v1648 = vunpack.c.l.s4 1934713408
        %v1649 = vunpack.c.0.s8 %v1648
        %v1650 = vlaneseq
        %v1651 = vshrl.u32 %v1650, 7
        %v1652 = vsub.s32 %v1649, %v1651
        %v1653 = vrot.slane %v1645, %v1652
        %v1655 = vunpack.c.l.s4 1934713408
        %v1656 = vunpack.c.0.s8 %v1655
        %v1657 = vlaneseq
        %v1658 = vshrl.u32 %v1657, 7
        %v1659 = vsub.s32 %v1656, %v1658
        %v1660 = vrot.slane %v1646, %v1659
        %v1661 = vcombine.low %v1637, %v1653
        %v1662 = vcombine.high %v1637, %v1653
        %v1663 = vcombine.low %v1644, %v1660
        %v1664 = vcombine.high %v1644, %v1660
        %v1665 = vpack.c.bf16 %v1661, %v1661
        %v1666 = vpack.c.bf16 %v1662, %v1662
        %v1667 = vpack.c.bf16 %v1663, %v1663
        %v1668 = vpack.c.bf16 %v1664, %v1664
        %v1670 = vlaneseq
        %v1671 = vshrl.u32 %v1670, 7
        %v1672 = vsub.s32 0, %v1671
        %v1673 = vrot.slane %v985, %v1672
        %vm1675 = vcmask 64512
        %v1677 = vsel %vm1675, %v1365, 0
        %v1680 = vsel %vm1675, %v1515, 0
        %1682 = vmatprep.subr.bf16.mxu0 0
        %1683 = vmatpush1.bf16.xpose.msra.mxu0 %v1680
        %1684 = vmatprep.subr.bf16.mxu0 0
        %1685 = vmatpush1.bf16.xpose.msra.mxu0 0
        %1686 = vmatprep.subr.bf16.mxu0 0
        %1687 = vmatpush1.bf16.xpose.msra.mxu0 0
        %1688 = vmatprep.subr.bf16.mxu0 0
        %1689 = vmatpush1.bf16.xpose.msra.mxu0 0
        %1690 = vmatprep.subr.bf16.mxu0 0
        %1691 = vmatpush1.bf16.xpose.msra.mxu0 0
        %1692 = vmatprep.subr.bf16.mxu0 0
        %1693 = vmatpush1.bf16.xpose.msra.mxu0 0
        %1694 = vmatprep.subr.bf16.mxu0 0
        %1695 = vmatpush1.bf16.xpose.msra.mxu0 0
        %1696 = vmatprep.subr.bf16.mxu0 0
        %1697 = vmatpush1.bf16.xpose.msra.mxu0 0
        %1698 = vmatprep.subr.bf16.mxu0 0
        %1699 = vmatpush1.bf16.xpose.msra.mxu0 0
        %1700 = vmatprep.subr.bf16.mxu0 0
        %1701 = vmatpush1.bf16.xpose.msra.mxu0 0
        %1702 = vmatprep.subr.bf16.mxu0 0
        %1703 = vmatpush1.bf16.xpose.msra.mxu0 0
        %1704 = vmatprep.subr.bf16.mxu0 0
        %1705 = vmatpush1.bf16.xpose.msra.mxu0 0
        %1706 = vmatprep.subr.bf16.mxu0 0
        %1707 = vmatpush1.bf16.xpose.msra.mxu0 0
        %1708 = vmatprep.subr.bf16.mxu0 0
        %1709 = vmatpush1.bf16.xpose.msra.mxu0 0
        %1710 = vmatprep.subr.bf16.mxu0 0
        %1711 = vmatpush1.bf16.xpose.msra.mxu0 0
        %1712 = vmatprep.subr.bf16.mxu0 0
        %1713 = vmatpush1.bf16.xpose.msra.mxu0 0
        %1714 = vmatprep.mubr.bf16.mxu0 0
        %1715 = vmatmul.mubr.bf16.gmra.mrb[0].mxu0 %v1677
        %v1716 = vpop.f32.mrb[0].mxu0
        %v1717 = vadd.f32 %v1673, %v1716
        %v1718 = vpop.f32.mrb[0].mxu0
        %v1719 = vpop.f32.mrb[0].mxu0
        %v1720 = vpop.f32.mrb[0].mxu0
        %1721 = vdwg.mxu0
        %v1723 = vsel %vm1675, %v1366, 0
        %v1726 = vsel %vm1675, %v1516, 0
        %1728 = vmatprep.subr.bf16.mxu0 0
        %1729 = vmatpush1.bf16.xpose.msra.mxu0 %v1726
        %1730 = vmatprep.subr.bf16.mxu0 0
        %1731 = vmatpush1.bf16.xpose.msra.mxu0 0
        %1732 = vmatprep.subr.bf16.mxu0 0
        %1733 = vmatpush1.bf16.xpose.msra.mxu0 0
        %1734 = vmatprep.subr.bf16.mxu0 0
        %1735 = vmatpush1.bf16.xpose.msra.mxu0 0
        %1736 = vmatprep.subr.bf16.mxu0 0
        %1737 = vmatpush1.bf16.xpose.msra.mxu0 0
        %1738 = vmatprep.subr.bf16.mxu0 0
        %1739 = vmatpush1.bf16.xpose.msra.mxu0 0
        %1740 = vmatprep.subr.bf16.mxu0 0
        %1741 = vmatpush1.bf16.xpose.msra.mxu0 0
        %1742 = vmatprep.subr.bf16.mxu0 0
        %1743 = vmatpush1.bf16.xpose.msra.mxu0 0
        %1744 = vmatprep.subr.bf16.mxu0 0
        %1745 = vmatpush1.bf16.xpose.msra.mxu0 0
        %1746 = vmatprep.subr.bf16.mxu0 0
        %1747 = vmatpush1.bf16.xpose.msra.mxu0 0
        %1748 = vmatprep.subr.bf16.mxu0 0
        %1749 = vmatpush1.bf16.xpose.msra.mxu0 0
        %1750 = vmatprep.subr.bf16.mxu0 0
        %1751 = vmatpush1.bf16.xpose.msra.mxu0 0
        %1752 = vmatprep.subr.bf16.mxu0 0
        %1753 = vmatpush1.bf16.xpose.msra.mxu0 0
        %1754 = vmatprep.subr.bf16.mxu0 0
        %1755 = vmatpush1.bf16.xpose.msra.mxu0 0
        %1756 = vmatprep.subr.bf16.mxu0 0
        %1757 = vmatpush1.bf16.xpose.msra.mxu0 0
        %1758 = vmatprep.subr.bf16.mxu0 0
        %1759 = vmatpush1.bf16.xpose.msra.mxu0 0
        %1760 = vmatprep.mubr.bf16.mxu0 0
        %1761 = vmatmul.mubr.bf16.gmra.mrb[0].mxu0 %v1723
        %v1762 = vpop.f32.mrb[0].mxu0
        %v1763 = vadd.f32 %v1673, %v1762
        %v1764 = vpop.f32.mrb[0].mxu0
        %v1765 = vpop.f32.mrb[0].mxu0
        %v1766 = vpop.f32.mrb[0].mxu0
        %1767 = vdwg.mxu0
        %v1769 = vsel %vm1675, %v1367, 0
        %v1772 = vsel %vm1675, %v1517, 0
        %1774 = vmatprep.subr.bf16.mxu0 0
        %1775 = vmatpush1.bf16.xpose.msra.mxu0 %v1772
        %1776 = vmatprep.subr.bf16.mxu0 0
        %1777 = vmatpush1.bf16.xpose.msra.mxu0 0
        %1778 = vmatprep.subr.bf16.mxu0 0
        %1779 = vmatpush1.bf16.xpose.msra.mxu0 0
        %1780 = vmatprep.subr.bf16.mxu0 0
        %1781 = vmatpush1.bf16.xpose.msra.mxu0 0
        %1782 = vmatprep.subr.bf16.mxu0 0
        %1783 = vmatpush1.bf16.xpose.msra.mxu0 0
        %1784 = vmatprep.subr.bf16.mxu0 0
        %1785 = vmatpush1.bf16.xpose.msra.mxu0 0
        %1786 = vmatprep.subr.bf16.mxu0 0
        %1787 = vmatpush1.bf16.xpose.msra.mxu0 0
        %1788 = vmatprep.subr.bf16.mxu0 0
        %1789 = vmatpush1.bf16.xpose.msra.mxu0 0
        %1790 = vmatprep.subr.bf16.mxu0 0
        %1791 = vmatpush1.bf16.xpose.msra.mxu0 0
        %1792 = vmatprep.subr.bf16.mxu0 0
        %1793 = vmatpush1.bf16.xpose.msra.mxu0 0
        %1794 = vmatprep.subr.bf16.mxu0 0
        %1795 = vmatpush1.bf16.xpose.msra.mxu0 0
        %1796 = vmatprep.subr.bf16.mxu0 0
        %1797 = vmatpush1.bf16.xpose.msra.mxu0 0
        %1798 = vmatprep.subr.bf16.mxu0 0
        %1799 = vmatpush1.bf16.xpose.msra.mxu0 0
        %1800 = vmatprep.subr.bf16.mxu0 0
        %1801 = vmatpush1.bf16.xpose.msra.mxu0 0
        %1802 = vmatprep.subr.bf16.mxu0 0
        %1803 = vmatpush1.bf16.xpose.msra.mxu0 0
        %1804 = vmatprep.subr.bf16.mxu0 0
        %1805 = vmatpush1.bf16.xpose.msra.mxu0 0
        %1806 = vmatprep.mubr.bf16.mxu0 0
        %1807 = vmatmul.mubr.bf16.gmra.mrb[0].mxu0 %v1769
        %v1808 = vpop.f32.mrb[0].mxu0
        %v1809 = vadd.f32 %v1673, %v1808
        %v1810 = vpop.f32.mrb[0].mxu0
        %v1811 = vpop.f32.mrb[0].mxu0
        %v1812 = vpop.f32.mrb[0].mxu0
        %1813 = vdwg.mxu0
        %v1815 = vsel %vm1675, %v1368, 0
        %v1818 = vsel %vm1675, %v1518, 0
        %1820 = vmatprep.subr.bf16.mxu0 0
        %1821 = vmatpush1.bf16.xpose.msra.mxu0 %v1818
        %1822 = vmatprep.subr.bf16.mxu0 0
        %1823 = vmatpush1.bf16.xpose.msra.mxu0 0
        %1824 = vmatprep.subr.bf16.mxu0 0
        %1825 = vmatpush1.bf16.xpose.msra.mxu0 0
        %1826 = vmatprep.subr.bf16.mxu0 0
        %1827 = vmatpush1.bf16.xpose.msra.mxu0 0
        %1828 = vmatprep.subr.bf16.mxu0 0
        %1829 = vmatpush1.bf16.xpose.msra.mxu0 0
        %1830 = vmatprep.subr.bf16.mxu0 0
        %1831 = vmatpush1.bf16.xpose.msra.mxu0 0
        %1832 = vmatprep.subr.bf16.mxu0 0
        %1833 = vmatpush1.bf16.xpose.msra.mxu0 0
        %1834 = vmatprep.subr.bf16.mxu0 0
        %1835 = vmatpush1.bf16.xpose.msra.mxu0 0
        %1836 = vmatprep.subr.bf16.mxu0 0
        %1837 = vmatpush1.bf16.xpose.msra.mxu0 0
        %1838 = vmatprep.subr.bf16.mxu0 0
        %1839 = vmatpush1.bf16.xpose.msra.mxu0 0
        %1840 = vmatprep.subr.bf16.mxu0 0
        %1841 = vmatpush1.bf16.xpose.msra.mxu0 0
        %1842 = vmatprep.subr.bf16.mxu0 0
        %1843 = vmatpush1.bf16.xpose.msra.mxu0 0
        %1844 = vmatprep.subr.bf16.mxu0 0
        %1845 = vmatpush1.bf16.xpose.msra.mxu0 0
        %1846 = vmatprep.subr.bf16.mxu0 0
        %1847 = vmatpush1.bf16.xpose.msra.mxu0 0
        %1848 = vmatprep.subr.bf16.mxu0 0
        %1849 = vmatpush1.bf16.xpose.msra.mxu0 0
        %1850 = vmatprep.subr.bf16.mxu0 0
        %1851 = vmatpush1.bf16.xpose.msra.mxu0 0
        %1852 = vmatprep.mubr.bf16.mxu0 0
        %1853 = vmatmul.mubr.bf16.gmra.mrb[0].mxu0 %v1815
        %v1854 = vpop.f32.mrb[0].mxu0
        %v1855 = vadd.f32 %v1673, %v1854
        %v1856 = vpop.f32.mrb[0].mxu0
        %v1857 = vpop.f32.mrb[0].mxu0
        %v1858 = vpop.f32.mrb[0].mxu0
        %1859 = vdwg.mxu0
        %v1860 = vsel %vm1675, %v1717, -inf
        %1861 = vmax.xlane.f32.xlu0 %v1860
        %v1862 = vpop.xlane.xlu0 %1861
        %v1863 = vsel %vm1675, %v1763, -inf
        %1864 = vmax.xlane.f32.xlu0 %v1863
        %v1865 = vpop.xlane.xlu0 %1864
        %v1866 = vsel %vm1675, %v1809, -inf
        %1867 = vmax.xlane.f32.xlu0 %v1866
        %v1868 = vpop.xlane.xlu0 %1867
        %v1869 = vsel %vm1675, %v1855, -inf
        %1870 = vmax.xlane.f32.xlu0 %v1869
        %v1871 = vpop.xlane.xlu0 %1870
        %v1872 = vsub.f32 %v1717, %v1862
        %v1873 = vsub.f32 %v1763, %v1865
        %v1874 = vsub.f32 %v1809, %v1868
        %v1875 = vsub.f32 %v1855, %v1871
        %v1876 = vmul.f32 %v1872, 1.442695
        %v1877 = vpow.pop %v1876
        %v1878 = vmul.f32 %v1873, 1.442695
        %v1879 = vpow.pop %v1878
        %v1880 = vmul.f32 %v1874, 1.442695
        %v1881 = vpow.pop %v1880
        %v1882 = vmul.f32 %v1875, 1.442695
        %v1883 = vpow.pop %v1882
        %v1884 = vsel %vm1675, %v1877, 0.0
        %1885 = vadd.xlane.f32.xlu0 %v1884
        %v1886 = vpop.xlane.xlu0 %1885
        %v1887 = vsel %vm1675, %v1879, 0.0
        %1888 = vadd.xlane.f32.xlu0 %v1887
        %v1889 = vpop.xlane.xlu0 %1888
        %v1890 = vsel %vm1675, %v1881, 0.0
        %1891 = vadd.xlane.f32.xlu0 %v1890
        %v1892 = vpop.xlane.xlu0 %1891
        %v1893 = vsel %vm1675, %v1883, 0.0
        %1894 = vadd.xlane.f32.xlu0 %v1893
        %v1895 = vpop.xlane.xlu0 %1894
        %v1896 = vrcp.pop %v1886
        %v1897 = vrcp.pop %v1889
        %v1898 = vrcp.pop %v1892
        %v1899 = vrcp.pop %v1895
        %v1900 = vmul.f32 %v1877, %v1896
        %v1901 = vmul.f32 %v1879, %v1897
        %v1902 = vmul.f32 %v1881, %v1898
        %v1903 = vmul.f32 %v1883, %v1899
        %v1904 = vpack.c.bf16 %v1900, %v1900
        %v1905 = vpack.c.bf16 %v1901, %v1901
        %v1906 = vpack.c.bf16 %v1902, %v1902
        %v1907 = vpack.c.bf16 %v1903, %v1903
        %v1909 = vsel %vm1675, %v1904, 0
        %vm1911 = vcmask 1043456
        %v1913 = vsel %vm1911, %v1665, 0
        %1915 = vmatprep.subr.bf16.mxu0 0
        %1916 = vmatpush1.bf16.msra.mxu0 %v1913
        %1917 = vmatprep.subr.bf16.mxu0 0
        %1918 = vmatpush1.bf16.msra.mxu0 0
        %1919 = vmatprep.subr.bf16.mxu0 0
        %1920 = vmatpush1.bf16.msra.mxu0 0
        %1921 = vmatprep.subr.bf16.mxu0 0
        %1922 = vmatpush1.bf16.msra.mxu0 0
        %1923 = vmatprep.subr.bf16.mxu0 0
        %1924 = vmatpush1.bf16.msra.mxu0 0
        %1925 = vmatprep.subr.bf16.mxu0 0
        %1926 = vmatpush1.bf16.msra.mxu0 0
        %1927 = vmatprep.subr.bf16.mxu0 0
        %1928 = vmatpush1.bf16.msra.mxu0 0
        %1929 = vmatprep.subr.bf16.mxu0 0
        %1930 = vmatpush1.bf16.msra.mxu0 0
        %1931 = vmatprep.subr.bf16.mxu0 0
        %1932 = vmatpush1.bf16.msra.mxu0 0
        %1933 = vmatprep.subr.bf16.mxu0 0
        %1934 = vmatpush1.bf16.msra.mxu0 0
        %1935 = vmatprep.subr.bf16.mxu0 0
        %1936 = vmatpush1.bf16.msra.mxu0 0
        %1937 = vmatprep.subr.bf16.mxu0 0
        %1938 = vmatpush1.bf16.msra.mxu0 0
        %1939 = vmatprep.subr.bf16.mxu0 0
        %1940 = vmatpush1.bf16.msra.mxu0 0
        %1941 = vmatprep.subr.bf16.mxu0 0
        %1942 = vmatpush1.bf16.msra.mxu0 0
        %1943 = vmatprep.subr.bf16.mxu0 0
        %1944 = vmatpush1.bf16.msra.mxu0 0
        %1945 = vmatprep.subr.bf16.mxu0 0
        %1946 = vmatpush1.bf16.msra.mxu0 0
        %1947 = vmatprep.mubr.bf16.mxu0 0
        %1948 = vmatmul.mubr.bf16.gmra.mrb[0].mxu0 %v1909
        %v1949 = vpop.f32.mrb[0].mxu0
        %v1950 = vadd.f32 0.0, %v1949
        %v1951 = vpop.f32.mrb[0].mxu0
        %v1952 = vpop.f32.mrb[0].mxu0
        %v1953 = vpop.f32.mrb[0].mxu0
        %1954 = vdwg.mxu0
        %v1956 = vsel %vm1675, %v1905, 0
        %v1959 = vsel %vm1911, %v1666, 0
        %1961 = vmatprep.subr.bf16.mxu0 0
        %1962 = vmatpush1.bf16.msra.mxu0 %v1959
        %1963 = vmatprep.subr.bf16.mxu0 0
        %1964 = vmatpush1.bf16.msra.mxu0 0
        %1965 = vmatprep.subr.bf16.mxu0 0
        %1966 = vmatpush1.bf16.msra.mxu0 0
        %1967 = vmatprep.subr.bf16.mxu0 0
        %1968 = vmatpush1.bf16.msra.mxu0 0
        %1969 = vmatprep.subr.bf16.mxu0 0
        %1970 = vmatpush1.bf16.msra.mxu0 0
        %1971 = vmatprep.subr.bf16.mxu0 0
        %1972 = vmatpush1.bf16.msra.mxu0 0
        %1973 = vmatprep.subr.bf16.mxu0 0
        %1974 = vmatpush1.bf16.msra.mxu0 0
        %1975 = vmatprep.subr.bf16.mxu0 0
        %1976 = vmatpush1.bf16.msra.mxu0 0
        %1977 = vmatprep.subr.bf16.mxu0 0
        %1978 = vmatpush1.bf16.msra.mxu0 0
        %1979 = vmatprep.subr.bf16.mxu0 0
        %1980 = vmatpush1.bf16.msra.mxu0 0
        %1981 = vmatprep.subr.bf16.mxu0 0
        %1982 = vmatpush1.bf16.msra.mxu0 0
        %1983 = vmatprep.subr.bf16.mxu0 0
        %1984 = vmatpush1.bf16.msra.mxu0 0
        %1985 = vmatprep.subr.bf16.mxu0 0
        %1986 = vmatpush1.bf16.msra.mxu0 0
        %1987 = vmatprep.subr.bf16.mxu0 0
        %1988 = vmatpush1.bf16.msra.mxu0 0
        %1989 = vmatprep.subr.bf16.mxu0 0
        %1990 = vmatpush1.bf16.msra.mxu0 0
        %1991 = vmatprep.subr.bf16.mxu0 0
        %1992 = vmatpush1.bf16.msra.mxu0 0
        %1993 = vmatprep.mubr.bf16.mxu0 0
        %1994 = vmatmul.mubr.bf16.gmra.mrb[0].mxu0 %v1956
        %v1995 = vpop.f32.mrb[0].mxu0
        %v1996 = vadd.f32 0.0, %v1995
        %v1997 = vpop.f32.mrb[0].mxu0
        %v1998 = vpop.f32.mrb[0].mxu0
        %v1999 = vpop.f32.mrb[0].mxu0
        %2000 = vdwg.mxu0
        %v2002 = vsel %vm1675, %v1906, 0
        %v2005 = vsel %vm1911, %v1667, 0
        %2007 = vmatprep.subr.bf16.mxu0 0
        %2008 = vmatpush1.bf16.msra.mxu0 %v2005
        %2009 = vmatprep.subr.bf16.mxu0 0
        %2010 = vmatpush1.bf16.msra.mxu0 0
        %2011 = vmatprep.subr.bf16.mxu0 0
        %2012 = vmatpush1.bf16.msra.mxu0 0
        %2013 = vmatprep.subr.bf16.mxu0 0
        %2014 = vmatpush1.bf16.msra.mxu0 0
        %2015 = vmatprep.subr.bf16.mxu0 0
        %2016 = vmatpush1.bf16.msra.mxu0 0
        %2017 = vmatprep.subr.bf16.mxu0 0
        %2018 = vmatpush1.bf16.msra.mxu0 0
        %2019 = vmatprep.subr.bf16.mxu0 0
        %2020 = vmatpush1.bf16.msra.mxu0 0
        %2021 = vmatprep.subr.bf16.mxu0 0
        %2022 = vmatpush1.bf16.msra.mxu0 0
        %2023 = vmatprep.subr.bf16.mxu0 0
        %2024 = vmatpush1.bf16.msra.mxu0 0
        %2025 = vmatprep.subr.bf16.mxu0 0
        %2026 = vmatpush1.bf16.msra.mxu0 0
        %2027 = vmatprep.subr.bf16.mxu0 0
        %2028 = vmatpush1.bf16.msra.mxu0 0
        %2029 = vmatprep.subr.bf16.mxu0 0
        %2030 = vmatpush1.bf16.msra.mxu0 0
        %2031 = vmatprep.subr.bf16.mxu0 0
        %2032 = vmatpush1.bf16.msra.mxu0 0
        %2033 = vmatprep.subr.bf16.mxu0 0
        %2034 = vmatpush1.bf16.msra.mxu0 0
        %2035 = vmatprep.subr.bf16.mxu0 0
        %2036 = vmatpush1.bf16.msra.mxu0 0
        %2037 = vmatprep.subr.bf16.mxu0 0
        %2038 = vmatpush1.bf16.msra.mxu0 0
        %2039 = vmatprep.mubr.bf16.mxu0 0
        %2040 = vmatmul.mubr.bf16.gmra.mrb[0].mxu0 %v2002
        %v2041 = vpop.f32.mrb[0].mxu0
        %v2042 = vadd.f32 0.0, %v2041
        %v2043 = vpop.f32.mrb[0].mxu0
        %v2044 = vpop.f32.mrb[0].mxu0
        %v2045 = vpop.f32.mrb[0].mxu0
        %2046 = vdwg.mxu0
        %v2048 = vsel %vm1675, %v1907, 0
        %v2051 = vsel %vm1911, %v1668, 0
        %2053 = vmatprep.subr.bf16.mxu0 0
        %2054 = vmatpush1.bf16.msra.mxu0 %v2051
        %2055 = vmatprep.subr.bf16.mxu0 0
        %2056 = vmatpush1.bf16.msra.mxu0 0
        %2057 = vmatprep.subr.bf16.mxu0 0
        %2058 = vmatpush1.bf16.msra.mxu0 0
        %2059 = vmatprep.subr.bf16.mxu0 0
        %2060 = vmatpush1.bf16.msra.mxu0 0
        %2061 = vmatprep.subr.bf16.mxu0 0
        %2062 = vmatpush1.bf16.msra.mxu0 0
        %2063 = vmatprep.subr.bf16.mxu0 0
        %2064 = vmatpush1.bf16.msra.mxu0 0
        %2065 = vmatprep.subr.bf16.mxu0 0
        %2066 = vmatpush1.bf16.msra.mxu0 0
        %2067 = vmatprep.subr.bf16.mxu0 0
        %2068 = vmatpush1.bf16.msra.mxu0 0
        %2069 = vmatprep.subr.bf16.mxu0 0
        %2070 = vmatpush1.bf16.msra.mxu0 0
        %2071 = vmatprep.subr.bf16.mxu0 0
        %2072 = vmatpush1.bf16.msra.mxu0 0
        %2073 = vmatprep.subr.bf16.mxu0 0
        %2074 = vmatpush1.bf16.msra.mxu0 0
        %2075 = vmatprep.subr.bf16.mxu0 0
        %2076 = vmatpush1.bf16.msra.mxu0 0
        %2077 = vmatprep.subr.bf16.mxu0 0
        %2078 = vmatpush1.bf16.msra.mxu0 0
        %2079 = vmatprep.subr.bf16.mxu0 0
        %2080 = vmatpush1.bf16.msra.mxu0 0
        %2081 = vmatprep.subr.bf16.mxu0 0
        %2082 = vmatpush1.bf16.msra.mxu0 0
        %2083 = vmatprep.subr.bf16.mxu0 0
        %2084 = vmatpush1.bf16.msra.mxu0 0
        %2085 = vmatprep.mubr.bf16.mxu0 0
        %2086 = vmatmul.mubr.bf16.gmra.mrb[0].mxu0 %v2048
        %v2087 = vpop.f32.mrb[0].mxu0
        %v2088 = vadd.f32 0.0, %v2087
        %v2089 = vpop.f32.mrb[0].mxu0
        %v2090 = vpop.f32.mrb[0].mxu0
        %v2091 = vpop.f32.mrb[0].mxu0
        %2092 = vdwg.mxu0
        %v2093 = vcombine.low %v1950, %v2042
        %v2094 = vcombine.high %v1950, %v2042
        %v2096 = vunpack.c.l.s4 1983009808
        %v2097 = vunpack.c.0.s8 %v2096
        %v2098 = vlaneseq
        %v2099 = vshrl.u32 %v2098, 7
        %v2100 = vsub.s32 %v2097, %v2099
        %v2101 = vrot.slane %v2093, %v2100
        %v2103 = vunpack.c.l.s4 1983009808
        %v2104 = vunpack.c.0.s8 %v2103
        %v2105 = vlaneseq
        %v2106 = vshrl.u32 %v2105, 7
        %v2107 = vsub.s32 %v2104, %v2106
        %v2108 = vrot.slane %v2094, %v2107
        %v2109 = vcombine.low %v1996, %v2088
        %v2110 = vcombine.high %v1996, %v2088
        %v2112 = vunpack.c.l.s4 1983009808
        %v2113 = vunpack.c.0.s8 %v2112
        %v2114 = vlaneseq
        %v2115 = vshrl.u32 %v2114, 7
        %v2116 = vsub.s32 %v2113, %v2115
        %v2117 = vrot.slane %v2109, %v2116
        %v2119 = vunpack.c.l.s4 1983009808
        %v2120 = vunpack.c.0.s8 %v2119
        %v2121 = vlaneseq
        %v2122 = vshrl.u32 %v2121, 7
        %v2123 = vsub.s32 %v2120, %v2122
        %v2124 = vrot.slane %v2110, %v2123
        %v2125 = vcombine.low %v2101, %v2117
        %v2126 = vcombine.high %v2101, %v2117
        %v2128 = vunpack.c.l.s4 1934713408
        %v2129 = vunpack.c.0.s8 %v2128
        %v2130 = vlaneseq
        %v2131 = vshrl.u32 %v2130, 7
        %v2132 = vsub.s32 %v2129, %v2131
        %v2133 = vrot.slane %v2125, %v2132
        %v2135 = vunpack.c.l.s4 1934713408
        %v2136 = vunpack.c.0.s8 %v2135
        %v2137 = vlaneseq
        %v2138 = vshrl.u32 %v2137, 7
        %v2139 = vsub.s32 %v2136, %v2138
        %v2140 = vrot.slane %v2126, %v2139
        %v2141 = vcombine.low %v2108, %v2124
        %v2142 = vcombine.high %v2108, %v2124
        %v2144 = vunpack.c.l.s4 1934713408
        %v2145 = vunpack.c.0.s8 %v2144
        %v2146 = vlaneseq
        %v2147 = vshrl.u32 %v2146, 7
        %v2148 = vsub.s32 %v2145, %v2147
        %v2149 = vrot.slane %v2141, %v2148
        %v2151 = vunpack.c.l.s4 1934713408
        %v2152 = vunpack.c.0.s8 %v2151
        %v2153 = vlaneseq
        %v2154 = vshrl.u32 %v2153, 7
        %v2155 = vsub.s32 %v2152, %v2154
        %v2156 = vrot.slane %v2142, %v2155
        %v2157 = vcombine.high %v2133, 0.0
        %v2158 = vcombine.high %v2140, 0.0
        %v2159 = vcombine.high %v2149, 0.0
        %v2160 = vcombine.high %v2156, 0.0
        %v2161 = vcombine.low %v2133, %v2140
        %v2163 = vunpack.c.l.s4 1983009808
        %v2164 = vunpack.c.0.s8 %v2163
        %v2165 = vlaneseq
        %v2166 = vshrl.u32 %v2165, 7
        %v2167 = vsub.s32 %v2164, %v2166
        %v2168 = vrot.slane %v2161, %v2167
        %v2169 = vcombine.low %v2157, %v2158
        %v2171 = vunpack.c.l.s4 1983009808
        %v2172 = vunpack.c.0.s8 %v2171
        %v2173 = vlaneseq
        %v2174 = vshrl.u32 %v2173, 7
        %v2175 = vsub.s32 %v2172, %v2174
        %v2176 = vrot.slane %v2169, %v2175
        %v2177 = vcombine.low %v2149, %v2156
        %v2179 = vunpack.c.l.s4 1983009808
        %v2180 = vunpack.c.0.s8 %v2179
        %v2181 = vlaneseq
        %v2182 = vshrl.u32 %v2181, 7
        %v2183 = vsub.s32 %v2180, %v2182
        %v2184 = vrot.slane %v2177, %v2183
        %v2185 = vcombine.low %v2159, %v2160
        %v2187 = vunpack.c.l.s4 1983009808
        %v2188 = vunpack.c.0.s8 %v2187
        %v2189 = vlaneseq
        %v2190 = vshrl.u32 %v2189, 7
        %v2191 = vsub.s32 %v2188, %v2190
        %v2192 = vrot.slane %v2185, %v2191
        %v2193 = vcombine.low %v2168, %v2176
        %v2194 = vcombine.high %v2168, %v2176
        %v2196 = vunpack.c.l.s4 1934713408
        %v2197 = vunpack.c.0.s8 %v2196
        %v2198 = vlaneseq
        %v2199 = vshrl.u32 %v2198, 7
        %v2200 = vsub.s32 %v2197, %v2199
        %v2201 = vrot.slane %v2193, %v2200
        %v2203 = vunpack.c.l.s4 1934713408
        %v2204 = vunpack.c.0.s8 %v2203
        %v2205 = vlaneseq
        %v2206 = vshrl.u32 %v2205, 7
        %v2207 = vsub.s32 %v2204, %v2206
        %v2208 = vrot.slane %v2194, %v2207
        %v2209 = vcombine.low %v2184, %v2192
        %v2210 = vcombine.high %v2184, %v2192
        %v2212 = vunpack.c.l.s4 1934713408
        %v2213 = vunpack.c.0.s8 %v2212
        %v2214 = vlaneseq
        %v2215 = vshrl.u32 %v2214, 7
        %v2216 = vsub.s32 %v2213, %v2215
        %v2217 = vrot.slane %v2209, %v2216
        %v2219 = vunpack.c.l.s4 1934713408
        %v2220 = vunpack.c.0.s8 %v2219
        %v2221 = vlaneseq
        %v2222 = vshrl.u32 %v2221, 7
        %v2223 = vsub.s32 %v2220, %v2222
        %v2224 = vrot.slane %v2210, %v2223
        %v2225 = vcombine.low %v2201, %v2217
        %v2226 = vcombine.high %v2201, %v2217
        %v2227 = vcombine.low %v2208, %v2224
        %v2228 = vcombine.high %v2208, %v2224
        %2230 = vrot.lane.b32.xlu0 %v2226, 8
        %v2231 = vpop.permute.xlu0 %2230
        %2234 = vrot.lane.b32.xlu0 %v2227, 16
        %v2235 = vpop.permute.xlu0 %2234
        %2238 = vrot.lane.b32.xlu0 %v2228, 24
        %v2239 = vpop.permute.xlu0 %2238
        %v2241 = vsel %vm1675, %v2225, %v2231
        %vm2242 = vcmask 130048
        %v2243 = vsel %vm2242, %v2241, %v2235
        %vm2244 = vcmask 195584
        %v2245 = vsel %vm2244, %v2243, %v2239
        %v2246 = vpack.c.bf16 %v2245, %v2245
        %v2247 = vld [vmem:[%s945] sm:$0xf]
        %v2248 = vld [vmem:[%s945 + $0x4] sm:$0xf]
        %v2249 = vld [vmem:[%s945 + $0x8] sm:$0xf]
        %v2250 = vld [vmem:[%s945 + $0xc] sm:$0xf]
        %v2251 = vld [vmem:[%s948] sm:$0x1]
        %v2253 = vlaneseq
        %v2254 = vshrl.u32 %v2253, 7
        %v2255 = vsub.s32 0, %v2254
        %v2256 = vrot.slane %v2251, %v2255
        %v2262 = vunpack.c.l.b16 %v2247
        %v2263 = vunpack.c.l.b16 %v2248
        %v2264 = vunpack.c.l.b16 %v2249
        %v2265 = vunpack.c.l.b16 %v2250
        %v2266 = vpack.c.b16 %v2263, %v2262
        %v2267 = vpack.c.b16 %v2265, %v2264
        %v2271 = vsel %vm988, %v2246, 0
        %2273 = vmatprep.subr.bf16.mxu0 0
        %2274 = vmatpush1.bf16.msra.mxu0 %v2266
        %2275 = vmatprep.subr.bf16.mxu0 0
        %2276 = vmatpush1.bf16.msra.mxu0 %v2267
        %2277 = vmatprep.subr.bf16.mxu0 0
        %2278 = vmatpush1.bf16.msra.mxu0 0
        %2279 = vmatprep.subr.bf16.mxu0 0
        %2280 = vmatpush1.bf16.msra.mxu0 0
        %2281 = vmatprep.subr.bf16.mxu0 0
        %2282 = vmatpush1.bf16.msra.mxu0 0
        %2283 = vmatprep.subr.bf16.mxu0 0
        %2284 = vmatpush1.bf16.msra.mxu0 0
        %2285 = vmatprep.subr.bf16.mxu0 0
        %2286 = vmatpush1.bf16.msra.mxu0 0
        %2287 = vmatprep.subr.bf16.mxu0 0
        %2288 = vmatpush1.bf16.msra.mxu0 0
        %2289 = vmatprep.subr.bf16.mxu0 0
        %2290 = vmatpush1.bf16.msra.mxu0 0
        %2291 = vmatprep.subr.bf16.mxu0 0
        %2292 = vmatpush1.bf16.msra.mxu0 0
        %2293 = vmatprep.subr.bf16.mxu0 0
        %2294 = vmatpush1.bf16.msra.mxu0 0
        %2295 = vmatprep.subr.bf16.mxu0 0
        %2296 = vmatpush1.bf16.msra.mxu0 0
        %2297 = vmatprep.subr.bf16.mxu0 0
        %2298 = vmatpush1.bf16.msra.mxu0 0
        %2299 = vmatprep.subr.bf16.mxu0 0
        %2300 = vmatpush1.bf16.msra.mxu0 0
        %2301 = vmatprep.subr.bf16.mxu0 0
        %2302 = vmatpush1.bf16.msra.mxu0 0
        %2303 = vmatprep.subr.bf16.mxu0 0
        %2304 = vmatpush1.bf16.msra.mxu0 0
        %2305 = vmatprep.mubr.bf16.mxu0 0
        %2306 = vmatmul.mubr.bf16.gmra.mrb[0].mxu0 %v2271
        %v2307 = vpop.f32.mrb[0].mxu0
        %v2308 = vadd.f32 %v2256, %v2307
        %v2309 = vpop.f32.mrb[0].mxu0
        %v2310 = vpop.f32.mrb[0].mxu0
        %v2311 = vpop.f32.mrb[0].mxu0
        %2312 = vdwg.mxu0
        %v2313 = vadd.f32 %v982, %v2308
        %v2314 = vld [vmem:[%s951] sm:$0x1]
        %v2315 = vld [vmem:[%s954] sm:$0x1]
        %v2316 = vsel %vm988, %v2313, 0.0
        %2317 = vadd.xlane.f32.xlu0 %v2316
        %v2318 = vpop.xlane.xlu0 %2317
        %v2319 = vmul.f32 %v2318, %v992
        %v2320 = vsub.f32 %v2313, %v2319
        %v2321 = vmul.f32 %v2320, %v2320
        %v2322 = vsel %vm988, %v2321, 0.0
        %2323 = vadd.xlane.f32.xlu0 %v2322
        %v2324 = vpop.xlane.xlu0 %2323
        %v2325 = vmul.f32 %v2324, 0.032258064
        %v2326 = vrsqrt.pop %v2325
        %v2327 = vmul.f32 %v2325, %v2326
        %vm2328 = vcmp.eq.f32.partialorder %v2325, inf
        %v2329 = vsel %vm2328, %v2325, %v2327
        %vm2330 = vcmp.eq.f32.partialorder %v2325, 0.0
        %v2331 = vand.u32 %v2325, 2147483648
        %v2332 = vsel %vm2330, %v2331, %v2329
        %v2333 = vadd.f32 %v2332, 1e-06
        %v2334 = vrcp.pop %v2333
        %v2335 = vmul.f32 1.0, %v2334
        %v2337 = vlaneseq
        %v2338 = vshrl.u32 %v2337, 7
        %v2339 = vsub.s32 0, %v2338
        %v2340 = vrot.slane %v2314, %v2339
        %v2342 = vmul.f32 %v2340, %v2320
        %v2343 = vmul.f32 %v2342, %v2335
        %v2345 = vlaneseq
        %v2346 = vshrl.u32 %v2345, 7
        %v2347 = vsub.s32 0, %v2346
        %v2348 = vrot.slane %v2315, %v2347
        %v2350 = vadd.f32 %v2343, %v2348
        %v2351 = vpack.c.bf16 %v2350, %v2350
        %v2352 = vld [vmem:[%s959] sm:$0xf]
        %v2353 = vld [vmem:[%s959 + $0x4] sm:$0xf]
        %v2354 = vld [vmem:[%s959 + $0x8] sm:$0xf]
        %v2355 = vld [vmem:[%s959 + $0xc] sm:$0xf]
        %v2356 = vld [vmem:[%s962] sm:$0x1]
        %v2358 = vlaneseq
        %v2359 = vshrl.u32 %v2358, 7
        %v2360 = vsub.s32 0, %v2359
        %v2361 = vrot.slane %v2356, %v2360
        %v2367 = vunpack.c.l.b16 %v2352
        %v2368 = vunpack.c.l.b16 %v2353
        %v2369 = vunpack.c.l.b16 %v2354
        %v2370 = vunpack.c.l.b16 %v2355
        %v2371 = vpack.c.b16 %v2368, %v2367
        %v2372 = vpack.c.b16 %v2370, %v2369
        %v2376 = vsel %vm988, %v2351, 0
        %2378 = vmatprep.subr.bf16.mxu0 0
        %2379 = vmatpush1.bf16.msra.mxu0 %v2371
        %2380 = vmatprep.subr.bf16.mxu0 0
        %2381 = vmatpush1.bf16.msra.mxu0 %v2372
        %2382 = vmatprep.subr.bf16.mxu0 0
        %2383 = vmatpush1.bf16.msra.mxu0 0
        %2384 = vmatprep.subr.bf16.mxu0 0
        %2385 = vmatpush1.bf16.msra.mxu0 0
        %2386 = vmatprep.subr.bf16.mxu0 0
        %2387 = vmatpush1.bf16.msra.mxu0 0
        %2388 = vmatprep.subr.bf16.mxu0 0
        %2389 = vmatpush1.bf16.msra.mxu0 0
        %2390 = vmatprep.subr.bf16.mxu0 0
        %2391 = vmatpush1.bf16.msra.mxu0 0
        %2392 = vmatprep.subr.bf16.mxu0 0
        %2393 = vmatpush1.bf16.msra.mxu0 0
        %2394 = vmatprep.subr.bf16.mxu0 0
        %2395 = vmatpush1.bf16.msra.mxu0 0
        %2396 = vmatprep.subr.bf16.mxu0 0
        %2397 = vmatpush1.bf16.msra.mxu0 0
        %2398 = vmatprep.subr.bf16.mxu0 0
        %2399 = vmatpush1.bf16.msra.mxu0 0
        %2400 = vmatprep.subr.bf16.mxu0 0
        %2401 = vmatpush1.bf16.msra.mxu0 0
        %2402 = vmatprep.subr.bf16.mxu0 0
        %2403 = vmatpush1.bf16.msra.mxu0 0
        %2404 = vmatprep.subr.bf16.mxu0 0
        %2405 = vmatpush1.bf16.msra.mxu0 0
        %2406 = vmatprep.subr.bf16.mxu0 0
        %2407 = vmatpush1.bf16.msra.mxu0 0
        %2408 = vmatprep.subr.bf16.mxu0 0
        %2409 = vmatpush1.bf16.msra.mxu0 0
        %2410 = vmatprep.mubr.bf16.mxu0 0
        %2411 = vmatmul.mubr.bf16.gmra.mrb[0].mxu0 %v2376
        %v2412 = vpop.f32.mrb[0].mxu0
        %v2413 = vadd.f32 %v2361, %v2412
        %v2414 = vpop.f32.mrb[0].mxu0
        %v2415 = vpop.f32.mrb[0].mxu0
        %v2416 = vpop.f32.mrb[0].mxu0
        %2417 = vdwg.mxu0
        %v2418 = vmax.f32 %v2413, 0.0
        %v2419 = vpack.c.bf16 %v2418, %v2418
        %v2420 = vld [vmem:[%s967] sm:$0xf]
        %v2421 = vld [vmem:[%s967 + $0x4] sm:$0xf]
        %v2422 = vld [vmem:[%s967 + $0x8] sm:$0xf]
        %v2423 = vld [vmem:[%s967 + $0xc] sm:$0xf]
        %v2424 = vld [vmem:[%s967 + $0x10] sm:$0xf]
        %v2425 = vld [vmem:[%s967 + $0x14] sm:$0xf]
        %v2426 = vld [vmem:[%s967 + $0x18] sm:$0xf]
        %v2427 = vld [vmem:[%s967 + $0x1c] sm:$0xf]
        %v2428 = vld [vmem:[%s967 + $0x20] sm:$0xf]
        %v2429 = vld [vmem:[%s967 + $0x24] sm:$0xf]
        %v2430 = vld [vmem:[%s967 + $0x28] sm:$0xf]
        %v2431 = vld [vmem:[%s967 + $0x2c] sm:$0xf]
        %v2432 = vld [vmem:[%s967 + $0x30] sm:$0xf]
        %v2433 = vld [vmem:[%s967 + $0x34] sm:$0xf]
        %v2434 = vld [vmem:[%s967 + $0x38] sm:$0xf]
        %v2435 = vld [vmem:[%s967 + $0x3c] sm:$0xf]
        %v2436 = vld [vmem:[%s970] sm:$0x1]
        %v2438 = vlaneseq
        %v2439 = vshrl.u32 %v2438, 7
        %v2440 = vsub.s32 0, %v2439
        %v2441 = vrot.slane %v2436, %v2440
        %v2459 = vunpack.c.l.b16 %v2420
        %v2460 = vunpack.c.l.b16 %v2421
        %v2461 = vunpack.c.l.b16 %v2422
        %v2462 = vunpack.c.l.b16 %v2423
        %v2463 = vunpack.c.l.b16 %v2424
        %v2464 = vunpack.c.l.b16 %v2425
        %v2465 = vunpack.c.l.b16 %v2426
        %v2466 = vunpack.c.l.b16 %v2427
        %v2467 = vunpack.c.l.b16 %v2428
        %v2468 = vunpack.c.l.b16 %v2429
        %v2469 = vunpack.c.l.b16 %v2430
        %v2470 = vunpack.c.l.b16 %v2431
        %v2471 = vunpack.c.l.b16 %v2432
        %v2472 = vunpack.c.l.b16 %v2433
        %v2473 = vunpack.c.l.b16 %v2434
        %v2474 = vunpack.c.l.b16 %v2435
        %v2475 = vpack.c.b16 %v2460, %v2459
        %v2476 = vpack.c.b16 %v2462, %v2461
        %v2477 = vpack.c.b16 %v2464, %v2463
        %v2478 = vpack.c.b16 %v2466, %v2465
        %v2479 = vpack.c.b16 %v2468, %v2467
        %v2480 = vpack.c.b16 %v2470, %v2469
        %v2481 = vpack.c.b16 %v2472, %v2471
        %v2482 = vpack.c.b16 %v2474, %v2473
        %2491 = vmatprep.subr.bf16.mxu0 0
        %2492 = vmatpush1.bf16.msra.mxu0 %v2475
        %2493 = vmatprep.subr.bf16.mxu0 0
        %2494 = vmatpush1.bf16.msra.mxu0 %v2476
        %2495 = vmatprep.subr.bf16.mxu0 0
        %2496 = vmatpush1.bf16.msra.mxu0 %v2477
        %2497 = vmatprep.subr.bf16.mxu0 0
        %2498 = vmatpush1.bf16.msra.mxu0 %v2478
        %2499 = vmatprep.subr.bf16.mxu0 0
        %2500 = vmatpush1.bf16.msra.mxu0 %v2479
        %2501 = vmatprep.subr.bf16.mxu0 0
        %2502 = vmatpush1.bf16.msra.mxu0 %v2480
        %2503 = vmatprep.subr.bf16.mxu0 0
        %2504 = vmatpush1.bf16.msra.mxu0 %v2481
        %2505 = vmatprep.subr.bf16.mxu0 0
        %2506 = vmatpush1.bf16.msra.mxu0 %v2482
        %2507 = vmatprep.subr.bf16.mxu0 0
        %2508 = vmatpush1.bf16.msra.mxu0 0
        %2509 = vmatprep.subr.bf16.mxu0 0
        %2510 = vmatpush1.bf16.msra.mxu0 0
        %2511 = vmatprep.subr.bf16.mxu0 0
        %2512 = vmatpush1.bf16.msra.mxu0 0
        %2513 = vmatprep.subr.bf16.mxu0 0
        %2514 = vmatpush1.bf16.msra.mxu0 0
        %2515 = vmatprep.subr.bf16.mxu0 0
        %2516 = vmatpush1.bf16.msra.mxu0 0
        %2517 = vmatprep.subr.bf16.mxu0 0
        %2518 = vmatpush1.bf16.msra.mxu0 0
        %2519 = vmatprep.subr.bf16.mxu0 0
        %2520 = vmatpush1.bf16.msra.mxu0 0
        %2521 = vmatprep.subr.bf16.mxu0 0
        %2522 = vmatpush1.bf16.msra.mxu0 0
        %2523 = vmatprep.mubr.bf16.mxu0 0
        %2524 = vmatmul.mubr.bf16.gmra.mrb[0].mxu0 %v2419
        %v2525 = vpop.f32.mrb[0].mxu0
        %v2526 = vadd.f32 %v2441, %v2525
        %v2527 = vpop.f32.mrb[0].mxu0
        %v2528 = vpop.f32.mrb[0].mxu0
        %v2529 = vpop.f32.mrb[0].mxu0
        %2530 = vdwg.mxu0
        %v2531 = vadd.f32 %v2313, %v2526
        %2532 = vst.msk [vmem:[#allocation2] sm:$0xff] %vm988, %v2531
        %p2533 = scmp.eq.s32.totalorder %s44, 1
        // Predicated region
        $region117: #{tpu_custom_call.1} parent=103 // pred_check
          %p2534 = pneg %p2533
        $region118: #{tpu_custom_call.1} parent=103 // pred_check_branch
          %2536 = sbr.rel (%p2534) target = $region120
        $region119: #{tpu_custom_call.1} parent=103 // pred_region
          %v2537 = vld [vmem:[%s19] sm:$0x1]
          %v2538 = vld [vmem:[%s20] sm:$0x1]
          %v2539 = vsel %vm988, %v2531, 0.0
          %2540 = vadd.xlane.f32.xlu0 %v2539
          %v2541 = vpop.xlane.xlu0 %2540
          %v2542 = vmul.f32 %v2541, %v992
          %v2543 = vsub.f32 %v2531, %v2542
          %v2544 = vmul.f32 %v2543, %v2543
          %v2545 = vsel %vm988, %v2544, 0.0
          %2546 = vadd.xlane.f32.xlu0 %v2545
          %v2547 = vpop.xlane.xlu0 %2546
          %v2548 = vmul.f32 %v2547, 0.032258064
          %v2549 = vrsqrt.pop %v2548
          %v2550 = vmul.f32 %v2548, %v2549
          %vm2551 = vcmp.eq.f32.partialorder %v2548, inf
          %v2552 = vsel %vm2551, %v2548, %v2550
          %vm2553 = vcmp.eq.f32.partialorder %v2548, 0.0
          %v2554 = vand.u32 %v2548, 2147483648
          %v2555 = vsel %vm2553, %v2554, %v2552
          %v2556 = vadd.f32 %v2555, 1e-06
          %v2557 = vrcp.pop %v2556
          %v2558 = vmul.f32 1.0, %v2557
          %v2560 = vlaneseq
          %v2561 = vshrl.u32 %v2560, 7
          %v2562 = vsub.s32 0, %v2561
          %v2563 = vrot.slane %v2537, %v2562
          %v2565 = vmul.f32 %v2563, %v2543
          %v2566 = vmul.f32 %v2565, %v2558
          %v2568 = vlaneseq
          %v2569 = vshrl.u32 %v2568, 7
          %v2570 = vsub.s32 0, %v2569
          %v2571 = vrot.slane %v2538, %v2570
          %v2573 = vadd.f32 %v2566, %v2571
          %2574 = vst.msk [vmem:[%s907] sm:$0xff] %vm988, %v2573
        $region120: #{tpu_custom_call.1} parent=103 // pred_fallthru
          _
        %s2575 = sand.u32 %s590, 1
        %s2576 = scalar_lea.sflag [#allocation5], %s2575
        %s2577 = sand.u32 %s590, 1
        %s2578 = smul.addr %s2577, 8
        %s2579 = scalar_lea.vmem [#allocation8], %s2578
        // Predicated region
        $region121: #{tpu_custom_call.1} parent=103 // pred_check
          %p2580 = pneg %p600
        $region122: #{tpu_custom_call.1} parent=103 // pred_check_branch
          %2582 = sbr.rel (%p2580) target = $region124
        $region123: #{tpu_custom_call.1} parent=103 // pred_region
          %s2584 = ssub.s32 128, 128
          %2585 = vsyncadd %s2576, %s2584
          %s2586 = smul.addr %s43, 128
          %s2587 = scalar_lea.hbm %s21, %s2586
          %s2589 = sshll.u32 %s2579, 4
          %s2590 = int_to_ptr.vmem [resolvable:$true] %s2589
          %2592 = dma.vmem_to_hbm [thread:$0]  %s2590, 128, %s2587, %s2576
        $region124: #{tpu_custom_call.1} parent=103 // pred_fallthru
          _
      $region104: #{tpu_custom_call.1} parent=5 // pred_fallthru
        _
      %p2593 = scmp.le.s32.totalorder 2, %s34
      // Predicated region
      $region125: #{tpu_custom_call.1} parent=5 // pred_check
        %p2594 = pneg %p2593
      $region126: #{tpu_custom_call.1} parent=5 // pred_check_branch
        %2596 = sbr.rel (%p2594) target = $region128
      $region127: #{tpu_custom_call.1} parent=5 // pred_region
        %s2597 = ssub.s32 %s34, 2
        // Predicated region
        $region129: #{tpu_custom_call.1} parent=127 // pred_check
          %p2598 = pneg %p606
        $region130: #{tpu_custom_call.1} parent=127 // pred_check_branch
          %2600 = sbr.rel (%p2598) target = $region132
        $region131: #{tpu_custom_call.1} parent=127 // pred_region
          %s2601 = sand.u32 %s591, 1
          %s2602 = scalar_lea.sflag [#allocation5], %s2601
          %s2603 = sand.u32 %s591, 1
          %s2604 = smul.addr %s2603, 8
          %s2605 = scalar_lea.vmem [#allocation8], %s2604
          %2606 = dma.done %s2602, 128
        $region132: #{tpu_custom_call.1} parent=127 // pred_fallthru
          _
      $region128: #{tpu_custom_call.1} parent=5 // pred_fallthru
        _
    $region6: #{tpu_custom_call.1} parent=1 // loop_footer
      %s38 = sadd.s32 1, %s34
    $region7: #{tpu_custom_call.1} parent=1 // loop_footer_branch
      %33 = sbr.rel target = $region3
    $region8: #{tpu_custom_call.1} parent=1 // loop_exit
      _
    %2607 = vsyncpa [#allocation4], 1
    %s2608 = scalar_lea.sflag [#allocation4], 1
    %2609 = vsyncpa %s2608, 1
    %2610 = vsyncpa [#allocation7], 1
    %2611 = vsyncpa [#allocation5], 1
    %s2612 = scalar_lea.sflag [#allocation5], 1
    %2613 = vsyncpa %s2612, 1

</llo_original>
